<compile_context>
chip_gen: v7x
topology: tpu7x:2x2x1
jax: 0.10.0
libtpu: 0.0.40
codegen_flags: <defaults>
</compile_context>

<pallas_src>
import math

import jax
import jax.numpy as jnp
from jax.experimental import pallas as pl
from jax.experimental.pallas import tpu as pltpu


# -------------------- model config (small, synthetic) --------------------
BATCH = 2
SEQ = 8
HIDDEN = 32
NUM_HEADS = 4
HEAD_DIM = HIDDEN // NUM_HEADS
INTERMEDIATE = 64
NUM_LAYERS = 2
VOCAB = 100
TYPE_VOCAB = 2
MAX_POS = 16
NUM_LABELS = 3
NUM_LABELS_PAD = 128          # lane-dense classifier output (sliced outside)
LN_EPS = 1e-12
_INV_SQRT2 = 0.7071067811865476


# ============================ fused encoder kernel ============================

def _layernorm(x, gamma, beta, eps=LN_EPS):
    # f32 LayerNorm over the last axis.
    mu = jnp.mean(x, axis=-1, keepdims=True)
    var = jnp.mean((x - mu) * (x - mu), axis=-1, keepdims=True)
    return (x - mu) * jax.lax.rsqrt(var + eps) * gamma + beta


def _encoder_kernel(emb_ref, mask_ref, embln_ref,
                    wqkv_ref, wo_ref, w1_ref, w2_ref, small_ref,
                    clsw_ref, clsb_ref,
                    logits_ref,
                    act_ref):
    """One layer grid step of the fused BERT encoder + classifier (full batch)."""
    B, S, H, NH, Dh, I = BATCH, SEQ, HIDDEN, NUM_HEADS, HEAD_DIM, INTERMEDIATE
    layer = pl.program_id(0)
    n_layers = pl.num_programs(0)

    # ---- layer step 0: residual-free embedding LayerNorm into the VMEM carrier ----
    @pl.when(layer == 0)
    def _init():
        act_ref[...] = _layernorm(emb_ref[...], embln_ref[0:1, :], embln_ref[1:2, :])

    h = act_ref[...]                               # (B, S, H) f32, resident across layers
    h2 = h.reshape(B * S, H)
    h_bf = h2.astype(jnp.bfloat16)
    mask = mask_ref[...]                           # (B, 1, S) additive key mask

    # ---- packed QKV projection: one (B*S, H) @ (H, 3H) matmul ----
    b_qkv = small_ref[0:1, 0:3 * H]                # (1, 3H)
    qkv = jnp.dot(h_bf, wqkv_ref[...],
                  preferred_element_type=jnp.float32) + b_qkv                # (B*S, 3H)
    qkv3 = qkv.reshape(B, S, 3 * H)

    # ---- multi-head self attention (bf16 MXU operands, f32 accumulation) ----
    scale = 1.0 / math.sqrt(Dh)
    ctx_parts = []
    for hd in range(NH):                           # static unroll over heads
        q = qkv3[:, :, hd * Dh:(hd + 1) * Dh].astype(jnp.bfloat16)           # (B, S, Dh)
        k = qkv3[:, :, H + hd * Dh:H + (hd + 1) * Dh].astype(jnp.bfloat16)
        v = qkv3[:, :, 2 * H + hd * Dh:2 * H + (hd + 1) * Dh].astype(jnp.bfloat16)
        s = jnp.einsum('bqd,bkd->bqk', q, k,
                       preferred_element_type=jnp.float32) * scale + mask    # (B, S, S)
        s = s - jnp.max(s, axis=-1, keepdims=True)
        p = jnp.exp(s)
        p = p * pl.reciprocal(jnp.sum(p, axis=-1, keepdims=True), approx=True)
        ctx_parts.append(jnp.einsum('bqk,bkd->bqd', p.astype(jnp.bfloat16), v,
                                    preferred_element_type=jnp.float32))     # (B, S, Dh)
    ctx = jnp.concatenate(ctx_parts, axis=-1)      # (B, S, H), heads concatenated

    # ---- output projection: one (B*S, H) @ (H, H) matmul against un-split Wo ----
    b_o = small_ref[1:2, 0:H]
    attn = jnp.dot(ctx.reshape(B * S, H).astype(jnp.bfloat16), wo_ref[...],
                   preferred_element_type=jnp.float32) + b_o                 # (B*S, H)
    attn = attn.reshape(B, S, H)

    x1 = _layernorm(attn + h, small_ref[2:3, 0:H], small_ref[3:4, 0:H])

    # ---- feed-forward (exact erf GELU, matching HF BERT "gelu") ----
    b1 = small_ref[4:5, 0:I]
    ff = jnp.dot(x1.reshape(B * S, H).astype(jnp.bfloat16), w1_ref[...],
                 preferred_element_type=jnp.float32) + b1                    # (B*S, I)
    ff = 0.5 * ff * (1.0 + jax.lax.erf(ff * _INV_SQRT2))
    b2 = small_ref[5:6, 0:H]
    ff2 = jnp.dot(ff.astype(jnp.bfloat16), w2_ref[...],
                  preferred_element_type=jnp.float32) + b2                   # (B*S, H)
    x2 = _layernorm(ff2.reshape(B, S, H) + x1,
                    small_ref[6:7, 0:H], small_ref[7:8, 0:H])
    act_ref[...] = x2                              # carry to the next layer step

    # ---- last layer: [CLS] token -> classifier (lane-dense, padded output) ----
    @pl.when(layer == n_layers - 1)
    def _classify():
        cls = x2[:, 0:1, :].reshape(B, H).astype(jnp.bfloat16)               # (B, H)
        logits_ref[...] = (
            jnp.dot(cls, clsw_ref[...], preferred_element_type=jnp.float32)
            + clsb_ref[...]
        ).astype(logits_ref.dtype)


# ============================ parameter init ============================

def init_params(key):
    def normal(k, shape):
        return 0.02 * jax.random.normal(k, shape, dtype=jnp.float32)

    keys = iter(jax.random.split(key, 8 + NUM_LAYERS * 8))
    p = {
        "word_emb": normal(next(keys), (VOCAB, HIDDEN)),
        "pos_emb": normal(next(keys), (MAX_POS, HIDDEN)),
        "type_emb": normal(next(keys), (TYPE_VOCAB, HIDDEN)),
        "emb_ln_g": jnp.ones((HIDDEN,), jnp.float32),
        "emb_ln_b": jnp.zeros((HIDDEN,), jnp.float32),
        "cls_w": normal(next(keys), (HIDDEN, NUM_LABELS)),
        "cls_b": jnp.zeros((NUM_LABELS,), jnp.float32),
        "layers": [],
    }
    for _ in range(NUM_LAYERS):
        layer = {
            "wq": normal(next(keys), (HIDDEN, HIDDEN)),
            "bq": jnp.zeros((HIDDEN,), jnp.float32),
            "wk": normal(next(keys), (HIDDEN, HIDDEN)),
            "bk": jnp.zeros((HIDDEN,), jnp.float32),
            "wv": normal(next(keys), (HIDDEN, HIDDEN)),
            "bv": jnp.zeros((HIDDEN,), jnp.float32),
            "wo": normal(next(keys), (HIDDEN, HIDDEN)),
            "bo": jnp.zeros((HIDDEN,), jnp.float32),
            "ln1_g": jnp.ones((HIDDEN,), jnp.float32),
            "ln1_b": jnp.zeros((HIDDEN,), jnp.float32),
            "w1": normal(next(keys), (HIDDEN, INTERMEDIATE)),
            "b1": jnp.zeros((INTERMEDIATE,), jnp.float32),
            "w2": normal(next(keys), (INTERMEDIATE, HIDDEN)),
            "b2": jnp.zeros((HIDDEN,), jnp.float32),
            "ln2_g": jnp.ones((HIDDEN,), jnp.float32),
            "ln2_b": jnp.zeros((HIDDEN,), jnp.float32),
        }
        p["layers"].append(layer)
    return p


# ============================ operand packing ============================

def _stack(layers, name):
    return jnp.stack([lyr[name] for lyr in layers], axis=0)


def _build_encoder_operands(params):
    """Stack / pack per-layer weights for the fused encoder kernel."""
    L, H, I = NUM_LAYERS, HIDDEN, INTERMEDIATE
    layers = params["layers"]

    # packed QKV weight: (L, H, 3H) bf16 -> one matmul per layer
    wqkv = jnp.stack(
        [jnp.concatenate([lyr["wq"], lyr["wk"], lyr["wv"]], axis=1) for lyr in layers],
        axis=0).astype(jnp.bfloat16)
    wo = _stack(layers, "wo").astype(jnp.bfloat16)         # (L, H, H), un-split heads
    w1 = _stack(layers, "w1").astype(jnp.bfloat16)         # (L, H, I)
    w2 = _stack(layers, "w2").astype(jnp.bfloat16)         # (L, I, H)

    # pack all tiny per-layer vectors into one (L, 8, 128) f32 tile
    small = jnp.zeros((L, 8, 128), jnp.float32)
    for li, lyr in enumerate(layers):
        bqkv = jnp.concatenate([lyr["bq"], lyr["bk"], lyr["bv"]], axis=0)
        small = small.at[li, 0, :3 * H].set(bqkv)
        small = small.at[li, 1, :H].set(lyr["bo"])
        small = small.at[li, 2, :H].set(lyr["ln1_g"])
        small = small.at[li, 3, :H].set(lyr["ln1_b"])
        small = small.at[li, 4, :I].set(lyr["b1"])
        small = small.at[li, 5, :H].set(lyr["b2"])
        small = small.at[li, 6, :H].set(lyr["ln2_g"])
        small = small.at[li, 7, :H].set(lyr["ln2_b"])

    clsw = (jnp.zeros((H, NUM_LABELS_PAD), jnp.float32)
            .at[:, :NUM_LABELS].set(params["cls_w"])).astype(jnp.bfloat16)
    clsb = jnp.zeros((1, NUM_LABELS_PAD), jnp.float32).at[0, :NUM_LABELS].set(params["cls_b"])
    embln = jnp.stack([params["emb_ln_g"], params["emb_ln_b"]], axis=0)      # (2, H)
    return wqkv, wo, w1, w2, small, clsw, clsb, embln


# ============================ forward pass ============================

@jax.jit
def bert_classifier_forward(params, input_ids, token_type_ids, attention_mask):
    B, S = input_ids.shape
    H, I, L = HIDDEN, INTERMEDIATE, NUM_LAYERS

    # ---- embeddings (gathers stay in plain JAX) ----
    emb = (params["word_emb"][input_ids]
           + params["pos_emb"][jnp.arange(S)][None, :, :]
           + params["type_emb"][token_type_ids]).astype(jnp.float32)        # (B, S, H)
    # additive attention mask: 0 where attended, -10000 where masked out
    mask_add = ((1.0 - attention_mask.astype(jnp.float32)) * -10000.0).reshape(B, 1, S)

    wqkv, wo, w1, w2, small, clsw, clsb, embln = _build_encoder_operands(params)

    def per_layer(shape):   # stacked per-layer weight: pick block along the layer axis
        return pl.BlockSpec((None,) + shape, lambda l: (l,) + (0,) * len(shape))

    def shared(shape):      # same block for every layer step
        return pl.BlockSpec(shape, lambda l: (0,) * len(shape))

    logits_pad = pl.pallas_call(
        _encoder_kernel,
        out_shape=jax.ShapeDtypeStruct((B, NUM_LABELS_PAD), jnp.float32),
        grid=(L,),
        in_specs=[
            shared((B, S, H)),                       # emb
            shared((B, 1, S)),                       # additive mask
            shared((2, H)),                          # embedding LN gamma/beta (packed)
            per_layer((H, 3 * H)),                   # packed Wqkv
            per_layer((H, H)),                       # Wo
            per_layer((H, I)),                       # W1
            per_layer((I, H)),                       # W2
            per_layer((8, 128)),                     # packed biases / LN params
            shared((H, NUM_LABELS_PAD)),             # classifier W (lane-padded)
            shared((1, NUM_LABELS_PAD)),             # classifier b
        ],
        out_specs=pl.BlockSpec((B, NUM_LABELS_PAD), lambda l: (0, 0)),
        scratch_shapes=[pltpu.VMEM((B, S, H), jnp.float32)],   # resident activations
        compiler_params=pltpu.CompilerParams(
            dimension_semantics=("arbitrary",),      # layers are sequential (carried state)
        ),
    )(emb, mask_add, embln, wqkv, wo, w1, w2, small, clsw, clsb)

    # slice padded lane-dense logits back to NUM_LABELS
    return logits_pad[:, :NUM_LABELS]


# ============================ main ============================

if __name__ == "__main__":
    key = jax.random.PRNGKey(0)
    pkey, ikey = jax.random.split(key)
    params = init_params(pkey)

    input_ids = jax.random.randint(ikey, (BATCH, SEQ), 0, VOCAB, dtype=jnp.int32)
    token_type_ids = jnp.zeros((BATCH, SEQ), dtype=jnp.int32)
    attention_mask = jnp.ones((BATCH, SEQ), dtype=jnp.int32)
    # mask out last two tokens of the second sequence to exercise masking
    attention_mask = attention_mask.at[1, -2:].set(0)

    logits = bert_classifier_forward(params, input_ids, token_type_ids, attention_mask)
    logits = jax.block_until_ready(logits)
    assert logits.shape == (BATCH, NUM_LABELS)
    assert jnp.all(jnp.isfinite(logits))
    print("KERNEL_OK")
</pallas_src>

<mosaic_0001>
module attributes {stable_mosaic.version = 11 : i64} {
  func.func @_encoder_kernel(%arg0: i32, %arg1: memref<2x8x32xf32, #tpu.memory_space<vmem>>, %arg2: memref<2x1x8xf32, #tpu.memory_space<vmem>>, %arg3: memref<2x32xf32, #tpu.memory_space<vmem>>, %arg4: memref<1x32x96xbf16, #tpu.memory_space<vmem>>, %arg5: memref<1x32x32xbf16, #tpu.memory_space<vmem>>, %arg6: memref<1x32x64xbf16, #tpu.memory_space<vmem>>, %arg7: memref<1x64x32xbf16, #tpu.memory_space<vmem>>, %arg8: memref<1x8x128xf32, #tpu.memory_space<vmem>>, %arg9: memref<32x128xbf16, #tpu.memory_space<vmem>>, %arg10: memref<1x128xf32, #tpu.memory_space<vmem>>, %arg11: memref<2x128xf32, #tpu.memory_space<vmem>>, %arg12: memref<2x8x32xf32, #tpu.memory_space<vmem>>) attributes {dimension_semantics = [#tpu.dimension_semantics<arbitrary>], iteration_bounds = array<i64: 2>, scalar_prefetch = 0 : i64, scratch_operands = 1 : i64, tpu.core_type = #tpu.core_type<tc>, window_params = [{pipeline_mode = #tpu.pipeline_mode<synchronous>, transform_indices = @transform_0, window_bounds = array<i64: 2, 8, 32>}, {pipeline_mode = #tpu.pipeline_mode<synchronous>, transform_indices = @transform_1, window_bounds = array<i64: 2, 1, 8>}, {pipeline_mode = #tpu.pipeline_mode<synchronous>, transform_indices = @transform_2, window_bounds = array<i64: 2, 32>}, {transform_indices = @transform_3, window_bounds = array<i64: 1, 32, 96>}, {transform_indices = @transform_4, window_bounds = array<i64: 1, 32, 32>}, {transform_indices = @transform_5, window_bounds = array<i64: 1, 32, 64>}, {transform_indices = @transform_6, window_bounds = array<i64: 1, 64, 32>}, {transform_indices = @transform_7, window_bounds = array<i64: 1, 8, 128>}, {pipeline_mode = #tpu.pipeline_mode<synchronous>, transform_indices = @transform_8, window_bounds = array<i64: 32, 128>}, {pipeline_mode = #tpu.pipeline_mode<synchronous>, transform_indices = @transform_9, window_bounds = array<i64: 1, 128>}, {pipeline_mode = #tpu.pipeline_mode<synchronous>, transform_indices = @transform_10, window_bounds = array<i64: 2, 128>}]} {
    %c0_i32 = arith.constant 0 : i32
    %0 = arith.cmpi eq, %arg0, %c0_i32 : i32
    %1 = arith.extui %0 : i1 to i32
    %c0_i32_0 = arith.constant 0 : i32
    %2 = arith.cmpi ne, %1, %c0_i32_0 : i32
    scf.if %2 {
      %c0_75 = arith.constant 0 : index
      %c0_76 = arith.constant 0 : index
      %c0_77 = arith.constant 0 : index
      %210 = vector.load %arg1[%c0_75, %c0_76, %c0_77] : memref<2x8x32xf32, #tpu.memory_space<vmem>>, vector<2x8x32xf32>
      %c0_78 = arith.constant 0 : index
      %c0_79 = arith.constant 0 : index
      %211 = vector.load %arg3[%c0_78, %c0_79] : memref<2x32xf32, #tpu.memory_space<vmem>>, vector<1x32xf32>
      %c1_80 = arith.constant 1 : index
      %c0_81 = arith.constant 0 : index
      %212 = vector.load %arg3[%c1_80, %c0_81] : memref<2x32xf32, #tpu.memory_space<vmem>>, vector<1x32xf32>
      %cst_82 = arith.constant dense<0.000000e+00> : vector<2x8xf32>
      %213 = vector.multi_reduction <add>, %210, %cst_82 [2] : vector<2x8x32xf32> to vector<2x8xf32>
      %214 = vector.shape_cast %213 : vector<2x8xf32> to vector<2x8x1xf32>
      %cst_83 = arith.constant 3.200000e+01 : f32
      %215 = vector.broadcast %cst_83 : f32 to vector<2x8x1xf32>
      %216 = arith.divf %214, %215 : vector<2x8x1xf32>
      %217 = vector.broadcast %216 : vector<2x8x1xf32> to vector<2x8x32xf32>
      %218 = arith.subf %210, %217 : vector<2x8x32xf32>
      %219 = vector.broadcast %216 : vector<2x8x1xf32> to vector<2x8x32xf32>
      %220 = arith.subf %210, %219 : vector<2x8x32xf32>
      %221 = arith.mulf %218, %220 : vector<2x8x32xf32>
      %cst_84 = arith.constant dense<0.000000e+00> : vector<2x8xf32>
      %222 = vector.multi_reduction <add>, %221, %cst_84 [2] : vector<2x8x32xf32> to vector<2x8xf32>
      %223 = vector.shape_cast %222 : vector<2x8xf32> to vector<2x8x1xf32>
      %cst_85 = arith.constant 3.200000e+01 : f32
      %224 = vector.broadcast %cst_85 : f32 to vector<2x8x1xf32>
      %225 = arith.divf %223, %224 : vector<2x8x1xf32>
      %226 = vector.broadcast %216 : vector<2x8x1xf32> to vector<2x8x32xf32>
      %227 = arith.subf %210, %226 : vector<2x8x32xf32>
      %cst_86 = arith.constant 9.99999996E-13 : f32
      %228 = vector.broadcast %cst_86 : f32 to vector<2x8x1xf32>
      %229 = arith.addf %225, %228 : vector<2x8x1xf32>
      %230 = math.rsqrt %229 : vector<2x8x1xf32>
      %231 = vector.broadcast %230 : vector<2x8x1xf32> to vector<2x8x32xf32>
      %232 = arith.mulf %227, %231 : vector<2x8x32xf32>
      %233 = vector.shape_cast %211 : vector<1x32xf32> to vector<1x1x32xf32>
      %234 = vector.broadcast %233 : vector<1x1x32xf32> to vector<2x8x32xf32>
      %235 = arith.mulf %232, %234 : vector<2x8x32xf32>
      %236 = vector.shape_cast %212 : vector<1x32xf32> to vector<1x1x32xf32>
      %237 = vector.broadcast %236 : vector<1x1x32xf32> to vector<2x8x32xf32>
      %238 = arith.addf %235, %237 : vector<2x8x32xf32>
      %c0_87 = arith.constant 0 : index
      %c0_88 = arith.constant 0 : index
      %c0_89 = arith.constant 0 : index
      %239 = vector.load %arg12[%c0_87, %c0_88, %c0_89] : memref<2x8x32xf32, #tpu.memory_space<vmem>>, vector<2x8x32xf32>
      tpu.vector_store %arg12[%c0_87, %c0_88, %c0_89], %238 {strides = array<i32>} : memref<2x8x32xf32, #tpu.memory_space<vmem>>, vector<2x8x32xf32>,
    } else {
    }
    %c0 = arith.constant 0 : index
    %c0_1 = arith.constant 0 : index
    %c0_2 = arith.constant 0 : index
    %3 = vector.load %arg12[%c0, %c0_1, %c0_2] : memref<2x8x32xf32, #tpu.memory_space<vmem>>, vector<2x8x32xf32>
    %4 = vector.shape_cast %3 : vector<2x8x32xf32> to vector<16x32xf32>
    %5 = arith.truncf %4 : vector<16x32xf32> to vector<16x32xbf16>
    %c0_3 = arith.constant 0 : index
    %c0_4 = arith.constant 0 : index
    %c0_5 = arith.constant 0 : index
    %6 = vector.load %arg2[%c0_3, %c0_4, %c0_5] : memref<2x1x8xf32, #tpu.memory_space<vmem>>, vector<2x1x8xf32>
    %c0_6 = arith.constant 0 : index
    %c0_7 = arith.constant 0 : index
    %c0_8 = arith.constant 0 : index
    %7 = vector.load %arg8[%c0_6, %c0_7, %c0_8] : memref<1x8x128xf32, #tpu.memory_space<vmem>>, vector<1x1x96xf32>
    %8 = vector.shape_cast %7 : vector<1x1x96xf32> to vector<1x96xf32>
    %c0_9 = arith.constant 0 : index
    %c0_10 = arith.constant 0 : index
    %c0_11 = arith.constant 0 : index
    %9 = vector.load %arg4[%c0_9, %c0_10, %c0_11] : memref<1x32x96xbf16, #tpu.memory_space<vmem>>, vector<1x32x96xbf16>
    %10 = vector.shape_cast %9 : vector<1x32x96xbf16> to vector<32x96xbf16>
    %cst = arith.constant dense<0.000000e+00> : vector<16x96xf32>
    %11 = tpu.matmul %5, %10, %cst {dimension_numbers = #tpu.dot_dimension_numbers<[1], [0], [0], [1], [0, 0, 1, 1], [], []>} : vector<16x32xbf16>, vector<32x96xbf16>, vector<16x96xf32> -> vector<16x96xf32>
    %12 = vector.broadcast %8 : vector<1x96xf32> to vector<16x96xf32>
    %13 = arith.addf %11, %12 : vector<16x96xf32>
    %14 = vector.shape_cast %13 : vector<16x96xf32> to vector<2x8x96xf32>
    %15 = vector.extract_strided_slice %14 {offsets = [0, 0, 0], sizes = [2, 8, 8], strides = [1, 1, 1]} : vector<2x8x96xf32> to vector<2x8x8xf32>
    %16 = arith.truncf %15 : vector<2x8x8xf32> to vector<2x8x8xbf16>
    %17 = vector.extract_strided_slice %14 {offsets = [0, 0, 32], sizes = [2, 8, 8], strides = [1, 1, 1]} : vector<2x8x96xf32> to vector<2x8x8xf32>
    %18 = arith.truncf %17 : vector<2x8x8xf32> to vector<2x8x8xbf16>
    %19 = vector.extract_strided_slice %14 {offsets = [0, 0, 64], sizes = [2, 8, 8], strides = [1, 1, 1]} : vector<2x8x96xf32> to vector<2x8x8xf32>
    %20 = arith.truncf %19 : vector<2x8x8xf32> to vector<2x8x8xbf16>
    "tpu.trace_start"() <{level = 10 : i32, message = "bqd,bkd->bqk"}> : () -> ()
    %cst_12 = arith.constant dense<0.000000e+00> : vector<2x8x8xf32>
    %21 = tpu.matmul %16, %18, %cst_12 {dimension_numbers = #tpu.dot_dimension_numbers<[2], [2], [1], [1], [0, 0, 0, 1, 1, 1], [0], [0]>} : vector<2x8x8xbf16>, vector<2x8x8xbf16>, vector<2x8x8xf32> -> vector<2x8x8xf32>
    "tpu.trace_stop"() : () -> ()
    %cst_13 = arith.constant 0.353553385 : f32
    %22 = vector.broadcast %cst_13 : f32 to vector<2x8x8xf32>
    %23 = arith.mulf %21, %22 : vector<2x8x8xf32>
    %24 = vector.broadcast %6 : vector<2x1x8xf32> to vector<2x8x8xf32>
    %25 = arith.addf %23, %24 : vector<2x8x8xf32>
    %cst_14 = arith.constant dense<0xFF800000> : vector<2x8xf32>
    %26 = vector.multi_reduction <maximumf>, %25, %cst_14 [2] : vector<2x8x8xf32> to vector<2x8xf32>
    %27 = vector.shape_cast %26 : vector<2x8xf32> to vector<2x8x1xf32>
    %28 = vector.broadcast %27 : vector<2x8x1xf32> to vector<2x8x8xf32>
    %29 = arith.subf %25, %28 : vector<2x8x8xf32>
    %30 = math.exp %29 : vector<2x8x8xf32>
    %cst_15 = arith.constant dense<0.000000e+00> : vector<2x8xf32>
    %31 = vector.multi_reduction <add>, %30, %cst_15 [2] : vector<2x8x8xf32> to vector<2x8xf32>
    %32 = vector.shape_cast %31 : vector<2x8xf32> to vector<2x8x1xf32>
    %33 = tpu.reciprocal %32 {approx = true} : vector<2x8x1xf32> -> vector<2x8x1xf32>
    %34 = vector.broadcast %33 : vector<2x8x1xf32> to vector<2x8x8xf32>
    %35 = arith.mulf %30, %34 : vector<2x8x8xf32>
    %36 = arith.truncf %35 : vector<2x8x8xf32> to vector<2x8x8xbf16>
    "tpu.trace_start"() <{level = 10 : i32, message = "bqk,bkd->bqd"}> : () -> ()
    %cst_16 = arith.constant dense<0.000000e+00> : vector<2x8x8xf32>
    %37 = tpu.matmul %36, %20, %cst_16 {dimension_numbers = #tpu.dot_dimension_numbers<[2], [1], [1], [2], [0, 0, 0, 1, 1, 2], [0], [0]>} : vector<2x8x8xbf16>, vector<2x8x8xbf16>, vector<2x8x8xf32> -> vector<2x8x8xf32>
    "tpu.trace_stop"() : () -> ()
    %38 = vector.extract_strided_slice %14 {offsets = [0, 0, 8], sizes = [2, 8, 8], strides = [1, 1, 1]} : vector<2x8x96xf32> to vector<2x8x8xf32>
    %39 = arith.truncf %38 : vector<2x8x8xf32> to vector<2x8x8xbf16>
    %40 = vector.extract_strided_slice %14 {offsets = [0, 0, 40], sizes = [2, 8, 8], strides = [1, 1, 1]} : vector<2x8x96xf32> to vector<2x8x8xf32>
    %41 = arith.truncf %40 : vector<2x8x8xf32> to vector<2x8x8xbf16>
    %42 = vector.extract_strided_slice %14 {offsets = [0, 0, 72], sizes = [2, 8, 8], strides = [1, 1, 1]} : vector<2x8x96xf32> to vector<2x8x8xf32>
    %43 = arith.truncf %42 : vector<2x8x8xf32> to vector<2x8x8xbf16>
    "tpu.trace_start"() <{level = 10 : i32, message = "bqd,bkd->bqk"}> : () -> ()
    %cst_17 = arith.constant dense<0.000000e+00> : vector<2x8x8xf32>
    %44 = tpu.matmul %39, %41, %cst_17 {dimension_numbers = #tpu.dot_dimension_numbers<[2], [2], [1], [1], [0, 0, 0, 1, 1, 1], [0], [0]>} : vector<2x8x8xbf16>, vector<2x8x8xbf16>, vector<2x8x8xf32> -> vector<2x8x8xf32>
    "tpu.trace_stop"() : () -> ()
    %cst_18 = arith.constant 0.353553385 : f32
    %45 = vector.broadcast %cst_18 : f32 to vector<2x8x8xf32>
    %46 = arith.mulf %44, %45 : vector<2x8x8xf32>
    %47 = vector.broadcast %6 : vector<2x1x8xf32> to vector<2x8x8xf32>
    %48 = arith.addf %46, %47 : vector<2x8x8xf32>
    %cst_19 = arith.constant dense<0xFF800000> : vector<2x8xf32>
    %49 = vector.multi_reduction <maximumf>, %48, %cst_19 [2] : vector<2x8x8xf32> to vector<2x8xf32>
    %50 = vector.shape_cast %49 : vector<2x8xf32> to vector<2x8x1xf32>
    %51 = vector.broadcast %50 : vector<2x8x1xf32> to vector<2x8x8xf32>
    %52 = arith.subf %48, %51 : vector<2x8x8xf32>
    %53 = math.exp %52 : vector<2x8x8xf32>
    %cst_20 = arith.constant dense<0.000000e+00> : vector<2x8xf32>
    %54 = vector.multi_reduction <add>, %53, %cst_20 [2] : vector<2x8x8xf32> to vector<2x8xf32>
    %55 = vector.shape_cast %54 : vector<2x8xf32> to vector<2x8x1xf32>
    %56 = tpu.reciprocal %55 {approx = true} : vector<2x8x1xf32> -> vector<2x8x1xf32>
    %57 = vector.broadcast %56 : vector<2x8x1xf32> to vector<2x8x8xf32>
    %58 = arith.mulf %53, %57 : vector<2x8x8xf32>
    %59 = arith.truncf %58 : vector<2x8x8xf32> to vector<2x8x8xbf16>
    "tpu.trace_start"() <{level = 10 : i32, message = "bqk,bkd->bqd"}> : () -> ()
    %cst_21 = arith.constant dense<0.000000e+00> : vector<2x8x8xf32>
    %60 = tpu.matmul %59, %43, %cst_21 {dimension_numbers = #tpu.dot_dimension_numbers<[2], [1], [1], [2], [0, 0, 0, 1, 1, 2], [0], [0]>} : vector<2x8x8xbf16>, vector<2x8x8xbf16>, vector<2x8x8xf32> -> vector<2x8x8xf32>
    "tpu.trace_stop"() : () -> ()
    %61 = vector.extract_strided_slice %14 {offsets = [0, 0, 16], sizes = [2, 8, 8], strides = [1, 1, 1]} : vector<2x8x96xf32> to vector<2x8x8xf32>
    %62 = arith.truncf %61 : vector<2x8x8xf32> to vector<2x8x8xbf16>
    %63 = vector.extract_strided_slice %14 {offsets = [0, 0, 48], sizes = [2, 8, 8], strides = [1, 1, 1]} : vector<2x8x96xf32> to vector<2x8x8xf32>
    %64 = arith.truncf %63 : vector<2x8x8xf32> to vector<2x8x8xbf16>
    %65 = vector.extract_strided_slice %14 {offsets = [0, 0, 80], sizes = [2, 8, 8], strides = [1, 1, 1]} : vector<2x8x96xf32> to vector<2x8x8xf32>
    %66 = arith.truncf %65 : vector<2x8x8xf32> to vector<2x8x8xbf16>
    "tpu.trace_start"() <{level = 10 : i32, message = "bqd,bkd->bqk"}> : () -> ()
    %cst_22 = arith.constant dense<0.000000e+00> : vector<2x8x8xf32>
    %67 = tpu.matmul %62, %64, %cst_22 {dimension_numbers = #tpu.dot_dimension_numbers<[2], [2], [1], [1], [0, 0, 0, 1, 1, 1], [0], [0]>} : vector<2x8x8xbf16>, vector<2x8x8xbf16>, vector<2x8x8xf32> -> vector<2x8x8xf32>
    "tpu.trace_stop"() : () -> ()
    %cst_23 = arith.constant 0.353553385 : f32
    %68 = vector.broadcast %cst_23 : f32 to vector<2x8x8xf32>
    %69 = arith.mulf %67, %68 : vector<2x8x8xf32>
    %70 = vector.broadcast %6 : vector<2x1x8xf32> to vector<2x8x8xf32>
    %71 = arith.addf %69, %70 : vector<2x8x8xf32>
    %cst_24 = arith.constant dense<0xFF800000> : vector<2x8xf32>
    %72 = vector.multi_reduction <maximumf>, %71, %cst_24 [2] : vector<2x8x8xf32> to vector<2x8xf32>
    %73 = vector.shape_cast %72 : vector<2x8xf32> to vector<2x8x1xf32>
    %74 = vector.broadcast %73 : vector<2x8x1xf32> to vector<2x8x8xf32>
    %75 = arith.subf %71, %74 : vector<2x8x8xf32>
    %76 = math.exp %75 : vector<2x8x8xf32>
    %cst_25 = arith.constant dense<0.000000e+00> : vector<2x8xf32>
    %77 = vector.multi_reduction <add>, %76, %cst_25 [2] : vector<2x8x8xf32> to vector<2x8xf32>
    %78 = vector.shape_cast %77 : vector<2x8xf32> to vector<2x8x1xf32>
    %79 = tpu.reciprocal %78 {approx = true} : vector<2x8x1xf32> -> vector<2x8x1xf32>
    %80 = vector.broadcast %79 : vector<2x8x1xf32> to vector<2x8x8xf32>
    %81 = arith.mulf %76, %80 : vector<2x8x8xf32>
    %82 = arith.truncf %81 : vector<2x8x8xf32> to vector<2x8x8xbf16>
    "tpu.trace_start"() <{level = 10 : i32, message = "bqk,bkd->bqd"}> : () -> ()
    %cst_26 = arith.constant dense<0.000000e+00> : vector<2x8x8xf32>
    %83 = tpu.matmul %82, %66, %cst_26 {dimension_numbers = #tpu.dot_dimension_numbers<[2], [1], [1], [2], [0, 0, 0, 1, 1, 2], [0], [0]>} : vector<2x8x8xbf16>, vector<2x8x8xbf16>, vector<2x8x8xf32> -> vector<2x8x8xf32>
    "tpu.trace_stop"() : () -> ()
    %84 = vector.extract_strided_slice %14 {offsets = [0, 0, 24], sizes = [2, 8, 8], strides = [1, 1, 1]} : vector<2x8x96xf32> to vector<2x8x8xf32>
    %85 = arith.truncf %84 : vector<2x8x8xf32> to vector<2x8x8xbf16>
    %86 = vector.extract_strided_slice %14 {offsets = [0, 0, 56], sizes = [2, 8, 8], strides = [1, 1, 1]} : vector<2x8x96xf32> to vector<2x8x8xf32>
    %87 = arith.truncf %86 : vector<2x8x8xf32> to vector<2x8x8xbf16>
    %88 = vector.extract_strided_slice %14 {offsets = [0, 0, 88], sizes = [2, 8, 8], strides = [1, 1, 1]} : vector<2x8x96xf32> to vector<2x8x8xf32>
    %89 = arith.truncf %88 : vector<2x8x8xf32> to vector<2x8x8xbf16>
    "tpu.trace_start"() <{level = 10 : i32, message = "bqd,bkd->bqk"}> : () -> ()
    %cst_27 = arith.constant dense<0.000000e+00> : vector<2x8x8xf32>
    %90 = tpu.matmul %85, %87, %cst_27 {dimension_numbers = #tpu.dot_dimension_numbers<[2], [2], [1], [1], [0, 0, 0, 1, 1, 1], [0], [0]>} : vector<2x8x8xbf16>, vector<2x8x8xbf16>, vector<2x8x8xf32> -> vector<2x8x8xf32>
    "tpu.trace_stop"() : () -> ()
    %cst_28 = arith.constant 0.353553385 : f32
    %91 = vector.broadcast %cst_28 : f32 to vector<2x8x8xf32>
    %92 = arith.mulf %90, %91 : vector<2x8x8xf32>
    %93 = vector.broadcast %6 : vector<2x1x8xf32> to vector<2x8x8xf32>
    %94 = arith.addf %92, %93 : vector<2x8x8xf32>
    %cst_29 = arith.constant dense<0xFF800000> : vector<2x8xf32>
    %95 = vector.multi_reduction <maximumf>, %94, %cst_29 [2] : vector<2x8x8xf32> to vector<2x8xf32>
    %96 = vector.shape_cast %95 : vector<2x8xf32> to vector<2x8x1xf32>
    %97 = vector.broadcast %96 : vector<2x8x1xf32> to vector<2x8x8xf32>
    %98 = arith.subf %94, %97 : vector<2x8x8xf32>
    %99 = math.exp %98 : vector<2x8x8xf32>
    %cst_30 = arith.constant dense<0.000000e+00> : vector<2x8xf32>
    %100 = vector.multi_reduction <add>, %99, %cst_30 [2] : vector<2x8x8xf32> to vector<2x8xf32>
    %101 = vector.shape_cast %100 : vector<2x8xf32> to vector<2x8x1xf32>
    %102 = tpu.reciprocal %101 {approx = true} : vector<2x8x1xf32> -> vector<2x8x1xf32>
    %103 = vector.broadcast %102 : vector<2x8x1xf32> to vector<2x8x8xf32>
    %104 = arith.mulf %99, %103 : vector<2x8x8xf32>
    %105 = arith.truncf %104 : vector<2x8x8xf32> to vector<2x8x8xbf16>
    "tpu.trace_start"() <{level = 10 : i32, message = "bqk,bkd->bqd"}> : () -> ()
    %cst_31 = arith.constant dense<0.000000e+00> : vector<2x8x8xf32>
    %106 = tpu.matmul %105, %89, %cst_31 {dimension_numbers = #tpu.dot_dimension_numbers<[2], [1], [1], [2], [0, 0, 0, 1, 1, 2], [0], [0]>} : vector<2x8x8xbf16>, vector<2x8x8xbf16>, vector<2x8x8xf32> -> vector<2x8x8xf32>
    "tpu.trace_stop"() : () -> ()
    %107 = tpu.concatenate %37, %60, %83, %106 in 2 : vector<2x8x8xf32>, vector<2x8x8xf32>, vector<2x8x8xf32>, vector<2x8x8xf32> -> vector<2x8x32xf32>
    %c0_32 = arith.constant 0 : index
    %c1 = arith.constant 1 : index
    %c0_33 = arith.constant 0 : index
    %108 = vector.load %arg8[%c0_32, %c1, %c0_33] : memref<1x8x128xf32, #tpu.memory_space<vmem>>, vector<1x1x32xf32>
    %109 = vector.shape_cast %108 : vector<1x1x32xf32> to vector<1x32xf32>
    %110 = vector.shape_cast %107 : vector<2x8x32xf32> to vector<16x32xf32>
    %111 = arith.truncf %110 : vector<16x32xf32> to vector<16x32xbf16>
    %c0_34 = arith.constant 0 : index
    %c0_35 = arith.constant 0 : index
    %c0_36 = arith.constant 0 : index
    %112 = vector.load %arg5[%c0_34, %c0_35, %c0_36] : memref<1x32x32xbf16, #tpu.memory_space<vmem>>, vector<1x32x32xbf16>
    %113 = vector.shape_cast %112 : vector<1x32x32xbf16> to vector<32x32xbf16>
    %cst_37 = arith.constant dense<0.000000e+00> : vector<16x32xf32>
    %114 = tpu.matmul %111, %113, %cst_37 {dimension_numbers = #tpu.dot_dimension_numbers<[1], [0], [0], [1], [0, 0, 1, 1], [], []>} : vector<16x32xbf16>, vector<32x32xbf16>, vector<16x32xf32> -> vector<16x32xf32>
    %115 = vector.broadcast %109 : vector<1x32xf32> to vector<16x32xf32>
    %116 = arith.addf %114, %115 : vector<16x32xf32>
    %117 = vector.shape_cast %116 : vector<16x32xf32> to vector<2x8x32xf32>
    %118 = arith.addf %117, %3 : vector<2x8x32xf32>
    %c0_38 = arith.constant 0 : index
    %c2 = arith.constant 2 : index
    %c0_39 = arith.constant 0 : index
    %119 = vector.load %arg8[%c0_38, %c2, %c0_39] : memref<1x8x128xf32, #tpu.memory_space<vmem>>, vector<1x1x32xf32>
    %120 = vector.shape_cast %119 : vector<1x1x32xf32> to vector<1x32xf32>
    %c0_40 = arith.constant 0 : index
    %c3 = arith.constant 3 : index
    %c0_41 = arith.constant 0 : index
    %121 = vector.load %arg8[%c0_40, %c3, %c0_41] : memref<1x8x128xf32, #tpu.memory_space<vmem>>, vector<1x1x32xf32>
    %122 = vector.shape_cast %121 : vector<1x1x32xf32> to vector<1x32xf32>
    %cst_42 = arith.constant dense<0.000000e+00> : vector<2x8xf32>
    %123 = vector.multi_reduction <add>, %118, %cst_42 [2] : vector<2x8x32xf32> to vector<2x8xf32>
    %124 = vector.shape_cast %123 : vector<2x8xf32> to vector<2x8x1xf32>
    %cst_43 = arith.constant 3.200000e+01 : f32
    %125 = vector.broadcast %cst_43 : f32 to vector<2x8x1xf32>
    %126 = arith.divf %124, %125 : vector<2x8x1xf32>
    %127 = vector.broadcast %126 : vector<2x8x1xf32> to vector<2x8x32xf32>
    %128 = arith.subf %118, %127 : vector<2x8x32xf32>
    %129 = vector.broadcast %126 : vector<2x8x1xf32> to vector<2x8x32xf32>
    %130 = arith.subf %118, %129 : vector<2x8x32xf32>
    %131 = arith.mulf %128, %130 : vector<2x8x32xf32>
    %cst_44 = arith.constant dense<0.000000e+00> : vector<2x8xf32>
    %132 = vector.multi_reduction <add>, %131, %cst_44 [2] : vector<2x8x32xf32> to vector<2x8xf32>
    %133 = vector.shape_cast %132 : vector<2x8xf32> to vector<2x8x1xf32>
    %cst_45 = arith.constant 3.200000e+01 : f32
    %134 = vector.broadcast %cst_45 : f32 to vector<2x8x1xf32>
    %135 = arith.divf %133, %134 : vector<2x8x1xf32>
    %136 = vector.broadcast %126 : vector<2x8x1xf32> to vector<2x8x32xf32>
    %137 = arith.subf %118, %136 : vector<2x8x32xf32>
    %cst_46 = arith.constant 9.99999996E-13 : f32
    %138 = vector.broadcast %cst_46 : f32 to vector<2x8x1xf32>
    %139 = arith.addf %135, %138 : vector<2x8x1xf32>
    %140 = math.rsqrt %139 : vector<2x8x1xf32>
    %141 = vector.broadcast %140 : vector<2x8x1xf32> to vector<2x8x32xf32>
    %142 = arith.mulf %137, %141 : vector<2x8x32xf32>
    %143 = vector.shape_cast %120 : vector<1x32xf32> to vector<1x1x32xf32>
    %144 = vector.broadcast %143 : vector<1x1x32xf32> to vector<2x8x32xf32>
    %145 = arith.mulf %142, %144 : vector<2x8x32xf32>
    %146 = vector.shape_cast %122 : vector<1x32xf32> to vector<1x1x32xf32>
    %147 = vector.broadcast %146 : vector<1x1x32xf32> to vector<2x8x32xf32>
    %148 = arith.addf %145, %147 : vector<2x8x32xf32>
    %c0_47 = arith.constant 0 : index
    %c4 = arith.constant 4 : index
    %c0_48 = arith.constant 0 : index
    %149 = vector.load %arg8[%c0_47, %c4, %c0_48] : memref<1x8x128xf32, #tpu.memory_space<vmem>>, vector<1x1x64xf32>
    %150 = vector.shape_cast %149 : vector<1x1x64xf32> to vector<1x64xf32>
    %151 = vector.shape_cast %148 : vector<2x8x32xf32> to vector<16x32xf32>
    %152 = arith.truncf %151 : vector<16x32xf32> to vector<16x32xbf16>
    %c0_49 = arith.constant 0 : index
    %c0_50 = arith.constant 0 : index
    %c0_51 = arith.constant 0 : index
    %153 = vector.load %arg6[%c0_49, %c0_50, %c0_51] : memref<1x32x64xbf16, #tpu.memory_space<vmem>>, vector<1x32x64xbf16>
    %154 = vector.shape_cast %153 : vector<1x32x64xbf16> to vector<32x64xbf16>
    %cst_52 = arith.constant dense<0.000000e+00> : vector<16x64xf32>
    %155 = tpu.matmul %152, %154, %cst_52 {dimension_numbers = #tpu.dot_dimension_numbers<[1], [0], [0], [1], [0, 0, 1, 1], [], []>} : vector<16x32xbf16>, vector<32x64xbf16>, vector<16x64xf32> -> vector<16x64xf32>
    %156 = vector.broadcast %150 : vector<1x64xf32> to vector<16x64xf32>
    %157 = arith.addf %155, %156 : vector<16x64xf32>
    %cst_53 = arith.constant 5.000000e-01 : f32
    %158 = vector.broadcast %cst_53 : f32 to vector<16x64xf32>
    %159 = arith.mulf %158, %157 : vector<16x64xf32>
    %cst_54 = arith.constant 0.707106769 : f32
    %160 = vector.broadcast %cst_54 : f32 to vector<16x64xf32>
    %161 = arith.mulf %157, %160 : vector<16x64xf32>
    %162 = math.erf %161 : vector<16x64xf32>
    %cst_55 = arith.constant 1.000000e+00 : f32
    %163 = vector.broadcast %cst_55 : f32 to vector<16x64xf32>
    %164 = arith.addf %163, %162 : vector<16x64xf32>
    %165 = arith.mulf %159, %164 : vector<16x64xf32>
    %c0_56 = arith.constant 0 : index
    %c5 = arith.constant 5 : index
    %c0_57 = arith.constant 0 : index
    %166 = vector.load %arg8[%c0_56, %c5, %c0_57] : memref<1x8x128xf32, #tpu.memory_space<vmem>>, vector<1x1x32xf32>
    %167 = vector.shape_cast %166 : vector<1x1x32xf32> to vector<1x32xf32>
    %168 = arith.truncf %165 : vector<16x64xf32> to vector<16x64xbf16>
    %c0_58 = arith.constant 0 : index
    %c0_59 = arith.constant 0 : index
    %c0_60 = arith.constant 0 : index
    %169 = vector.load %arg7[%c0_58, %c0_59, %c0_60] : memref<1x64x32xbf16, #tpu.memory_space<vmem>>, vector<1x64x32xbf16>
    %170 = vector.shape_cast %169 : vector<1x64x32xbf16> to vector<64x32xbf16>
    %cst_61 = arith.constant dense<0.000000e+00> : vector<16x32xf32>
    %171 = tpu.matmul %168, %170, %cst_61 {dimension_numbers = #tpu.dot_dimension_numbers<[1], [0], [0], [1], [0, 0, 1, 1], [], []>} : vector<16x64xbf16>, vector<64x32xbf16>, vector<16x32xf32> -> vector<16x32xf32>
    %172 = vector.broadcast %167 : vector<1x32xf32> to vector<16x32xf32>
    %173 = arith.addf %171, %172 : vector<16x32xf32>
    %174 = vector.shape_cast %173 : vector<16x32xf32> to vector<2x8x32xf32>
    %175 = arith.addf %174, %148 : vector<2x8x32xf32>
    %c0_62 = arith.constant 0 : index
    %c6 = arith.constant 6 : index
    %c0_63 = arith.constant 0 : index
    %176 = vector.load %arg8[%c0_62, %c6, %c0_63] : memref<1x8x128xf32, #tpu.memory_space<vmem>>, vector<1x1x32xf32>
    %177 = vector.shape_cast %176 : vector<1x1x32xf32> to vector<1x32xf32>
    %c0_64 = arith.constant 0 : index
    %c7 = arith.constant 7 : index
    %c0_65 = arith.constant 0 : index
    %178 = vector.load %arg8[%c0_64, %c7, %c0_65] : memref<1x8x128xf32, #tpu.memory_space<vmem>>, vector<1x1x32xf32>
    %179 = vector.shape_cast %178 : vector<1x1x32xf32> to vector<1x32xf32>
    %cst_66 = arith.constant dense<0.000000e+00> : vector<2x8xf32>
    %180 = vector.multi_reduction <add>, %175, %cst_66 [2] : vector<2x8x32xf32> to vector<2x8xf32>
    %181 = vector.shape_cast %180 : vector<2x8xf32> to vector<2x8x1xf32>
    %cst_67 = arith.constant 3.200000e+01 : f32
    %182 = vector.broadcast %cst_67 : f32 to vector<2x8x1xf32>
    %183 = arith.divf %181, %182 : vector<2x8x1xf32>
    %184 = vector.broadcast %183 : vector<2x8x1xf32> to vector<2x8x32xf32>
    %185 = arith.subf %175, %184 : vector<2x8x32xf32>
    %186 = vector.broadcast %183 : vector<2x8x1xf32> to vector<2x8x32xf32>
    %187 = arith.subf %175, %186 : vector<2x8x32xf32>
    %188 = arith.mulf %185, %187 : vector<2x8x32xf32>
    %cst_68 = arith.constant dense<0.000000e+00> : vector<2x8xf32>
    %189 = vector.multi_reduction <add>, %188, %cst_68 [2] : vector<2x8x32xf32> to vector<2x8xf32>
    %190 = vector.shape_cast %189 : vector<2x8xf32> to vector<2x8x1xf32>
    %cst_69 = arith.constant 3.200000e+01 : f32
    %191 = vector.broadcast %cst_69 : f32 to vector<2x8x1xf32>
    %192 = arith.divf %190, %191 : vector<2x8x1xf32>
    %193 = vector.broadcast %183 : vector<2x8x1xf32> to vector<2x8x32xf32>
    %194 = arith.subf %175, %193 : vector<2x8x32xf32>
    %cst_70 = arith.constant 9.99999996E-13 : f32
    %195 = vector.broadcast %cst_70 : f32 to vector<2x8x1xf32>
    %196 = arith.addf %192, %195 : vector<2x8x1xf32>
    %197 = math.rsqrt %196 : vector<2x8x1xf32>
    %198 = vector.broadcast %197 : vector<2x8x1xf32> to vector<2x8x32xf32>
    %199 = arith.mulf %194, %198 : vector<2x8x32xf32>
    %200 = vector.shape_cast %177 : vector<1x32xf32> to vector<1x1x32xf32>
    %201 = vector.broadcast %200 : vector<1x1x32xf32> to vector<2x8x32xf32>
    %202 = arith.mulf %199, %201 : vector<2x8x32xf32>
    %203 = vector.shape_cast %179 : vector<1x32xf32> to vector<1x1x32xf32>
    %204 = vector.broadcast %203 : vector<1x1x32xf32> to vector<2x8x32xf32>
    %205 = arith.addf %202, %204 : vector<2x8x32xf32>
    %c0_71 = arith.constant 0 : index
    %c0_72 = arith.constant 0 : index
    %c0_73 = arith.constant 0 : index
    %206 = vector.load %arg12[%c0_71, %c0_72, %c0_73] : memref<2x8x32xf32, #tpu.memory_space<vmem>>, vector<2x8x32xf32>
    tpu.vector_store %arg12[%c0_71, %c0_72, %c0_73], %205 {strides = array<i32>} : memref<2x8x32xf32, #tpu.memory_space<vmem>>, vector<2x8x32xf32>,
    %c1_i32 = arith.constant 1 : i32
    %207 = arith.cmpi eq, %arg0, %c1_i32 : i32
    %208 = arith.extui %207 : i1 to i32
    %c0_i32_74 = arith.constant 0 : i32
    %209 = arith.cmpi ne, %208, %c0_i32_74 : i32
    scf.if %209 {
      %210 = vector.extract_strided_slice %205 {offsets = [0, 0, 0], sizes = [2, 1, 32], strides = [1, 1, 1]} : vector<2x8x32xf32> to vector<2x1x32xf32>
      %211 = vector.shape_cast %210 : vector<2x1x32xf32> to vector<2x32xf32>
      %212 = arith.truncf %211 : vector<2x32xf32> to vector<2x32xbf16>
      %c0_75 = arith.constant 0 : index
      %c0_76 = arith.constant 0 : index
      %213 = vector.load %arg9[%c0_75, %c0_76] : memref<32x128xbf16, #tpu.memory_space<vmem>>, vector<32x128xbf16>
      %cst_77 = arith.constant dense<0.000000e+00> : vector<2x128xf32>
      %214 = tpu.matmul %212, %213, %cst_77 {dimension_numbers = #tpu.dot_dimension_numbers<[1], [0], [0], [1], [0, 0, 1, 1], [], []>} : vector<2x32xbf16>, vector<32x128xbf16>, vector<2x128xf32> -> vector<2x128xf32>
      %c0_78 = arith.constant 0 : index
      %c0_79 = arith.constant 0 : index
      %215 = vector.load %arg10[%c0_78, %c0_79] : memref<1x128xf32, #tpu.memory_space<vmem>>, vector<1x128xf32>
      %216 = vector.broadcast %215 : vector<1x128xf32> to vector<2x128xf32>
      %217 = arith.addf %214, %216 : vector<2x128xf32>
      %c0_80 = arith.constant 0 : index
      %c0_81 = arith.constant 0 : index
      %218 = vector.load %arg11[%c0_80, %c0_81] : memref<2x128xf32, #tpu.memory_space<vmem>>, vector<2x128xf32>
      tpu.vector_store %arg11[%c0_80, %c0_81], %217 {strides = array<i32>} : memref<2x128xf32, #tpu.memory_space<vmem>>, vector<2x128xf32>,
    } else {
    }
    return
  }
  func.func @transform_0(%arg0: i32) -> (i32, i32, i32) {
    %c0_i32 = arith.constant 0 : i32
    %c0_i32_0 = arith.constant 0 : i32
    %c0_i32_1 = arith.constant 0 : i32
    %c0_i32_2 = arith.constant 0 : i32
    return %c0_i32, %c0_i32_0, %c0_i32_1 : i32, i32, i32
  }
  func.func @transform_1(%arg0: i32) -> (i32, i32, i32) {
    %c0_i32 = arith.constant 0 : i32
    %c0_i32_0 = arith.constant 0 : i32
    %c0_i32_1 = arith.constant 0 : i32
    %c0_i32_2 = arith.constant 0 : i32
    return %c0_i32, %c0_i32_0, %c0_i32_1 : i32, i32, i32
  }
  func.func @transform_2(%arg0: i32) -> (i32, i32) {
    %c0_i32 = arith.constant 0 : i32
    %c0_i32_0 = arith.constant 0 : i32
    %c0_i32_1 = arith.constant 0 : i32
    return %c0_i32, %c0_i32_0 : i32, i32
  }
  func.func @transform_3(%arg0: i32) -> (i32, i32, i32) {
    %c0_i32 = arith.constant 0 : i32
    %c0_i32_0 = arith.constant 0 : i32
    %c0_i32_1 = arith.constant 0 : i32
    return %arg0, %c0_i32, %c0_i32_0 : i32, i32, i32
  }
  func.func @transform_4(%arg0: i32) -> (i32, i32, i32) {
    %c0_i32 = arith.constant 0 : i32
    %c0_i32_0 = arith.constant 0 : i32
    %c0_i32_1 = arith.constant 0 : i32
    return %arg0, %c0_i32, %c0_i32_0 : i32, i32, i32
  }
  func.func @transform_5(%arg0: i32) -> (i32, i32, i32) {
    %c0_i32 = arith.constant 0 : i32
    %c0_i32_0 = arith.constant 0 : i32
    %c0_i32_1 = arith.constant 0 : i32
    return %arg0, %c0_i32, %c0_i32_0 : i32, i32, i32
  }
  func.func @transform_6(%arg0: i32) -> (i32, i32, i32) {
    %c0_i32 = arith.constant 0 : i32
    %c0_i32_0 = arith.constant 0 : i32
    %c0_i32_1 = arith.constant 0 : i32
    return %arg0, %c0_i32, %c0_i32_0 : i32, i32, i32
  }
  func.func @transform_7(%arg0: i32) -> (i32, i32, i32) {
    %c0_i32 = arith.constant 0 : i32
    %c0_i32_0 = arith.constant 0 : i32
    %c0_i32_1 = arith.constant 0 : i32
    return %arg0, %c0_i32, %c0_i32_0 : i32, i32, i32
  }
  func.func @transform_8(%arg0: i32) -> (i32, i32) {
    %c0_i32 = arith.constant 0 : i32
    %c0_i32_0 = arith.constant 0 : i32
    %c0_i32_1 = arith.constant 0 : i32
    return %c0_i32, %c0_i32_0 : i32, i32
  }
  func.func @transform_9(%arg0: i32) -> (i32, i32) {
    %c0_i32 = arith.constant 0 : i32
    %c0_i32_0 = arith.constant 0 : i32
    %c0_i32_1 = arith.constant 0 : i32
    return %c0_i32, %c0_i32_0 : i32, i32
  }
  func.func @transform_10(%arg0: i32) -> (i32, i32) {
    %c0_i32 = arith.constant 0 : i32
    %c0_i32_0 = arith.constant 0 : i32
    %c0_i32_1 = arith.constant 0 : i32
    return %c0_i32, %c0_i32_0 : i32, i32
  }
}

</mosaic_0001>

<llo_original>
// kernel: bert_classifier_forward.1
$region0: #{bert_classifier_forward.1}
  #allocation0 [shape = 'u32[]', space=smem, size = 0x4, offset = 0x4, fixed_abs, tag = 'smem constant byte address 0x4 - core index']
  #allocation1 [shape = 'u32[144,128]{1,0:T(1,128)}', space=vmem, size = 0x12000, scoped, tag = 'internal scratch']
  #allocation2 [shape = 'f32[2,8,32]{2,1,0:T(8,128)}', space=vmem, size = 0x2000, scoped, tag = 'scratch operand']
  %s0 = inlined_call_operand.vmem [shape: f32[2,8,32], index: 0, kind: input, shape index: {}]
  %s1 = inlined_call_operand.vmem [shape: f32[2,1,8], index: 1, kind: input, shape index: {}]
  %s2 = inlined_call_operand.vmem [shape: f32[2,32], index: 2, kind: input, shape index: {}]
  %s3 = inlined_call_operand.vmem [shape: bf16[2,32,96], index: 3, kind: input, shape index: {}]
  %s4 = inlined_call_operand.vmem [shape: bf16[2,32,32], index: 4, kind: input, shape index: {}]
  %s5 = inlined_call_operand.vmem [shape: bf16[2,32,64], index: 5, kind: input, shape index: {}]
  %s6 = inlined_call_operand.vmem [shape: bf16[2,64,32], index: 6, kind: input, shape index: {}]
  %s7 = inlined_call_operand.vmem [shape: f32[2,8,128], index: 7, kind: input, shape index: {}]
  %s8 = inlined_call_operand.vmem [shape: bf16[32,128], index: 8, kind: input, shape index: {}]
  %s9 = inlined_call_operand.vmem [shape: f32[1,128], index: 9, kind: input, shape index: {}]
  %s10 = inlined_call_operand.hbm [shape: f32[2,128], index: 10, kind: output, shape index: {}]
  %s11 = sld [smem:[#allocation0]]
  $region81: #{bert_classifier_forward.1} parent=0
    _
  %s13 = ssub.s32 1, %s11
  %s14 = scalar_select 0, %s13, %s11
  $region1: #{bert_classifier_forward.1} parent=0
    #allocation3 [shape = 'u8[1024]{0}', space=vmem, size = 0x400, scoped, tag = 'output window, operand 0, single buffered']
    #allocation4 [shape = 's32[2]{0}', space=sflag, size = 0x8, scoped, tag = 'scoped memory for bert_classifier_forward.1']
    %15 = vsyncpa [#allocation4], 0
    loop: start=0, step=1, limit=4
    $region2: #{bert_classifier_forward.1} parent=1 // loop_pre_header
      _
    $region3: #{bert_classifier_forward.1} parent=1 // loop_header
      %s17 = sphi 0, %s21
      %p18 = scmp.ge.s32.totalorder %s17, 4
      %s25 = sphi 0, %s25
      %s27 = sphi 0, %s25
      %s28 = sphi 0, %s27
      %s42 = sphi 0, %s28
      %s46 = sphi 0, %s46
      %s48 = sphi 0, %s46
      %s49 = sphi 0, %s48
      %s63 = sphi 0, %s49
      %s67 = sphi 0, %s67
      %s69 = sphi 0, %s67
      %s70 = sphi 0, %s69
      %s84 = sphi 0, %s70
      %s90 = sphi 0, %s92
      %s93 = sphi 0, %s90
      %s94 = sphi 0, %s93
      %s110 = sphi 0, %s94
      %s116 = sphi 0, %s118
      %s119 = sphi 0, %s116
      %s120 = sphi 0, %s119
      %s136 = sphi 0, %s120
      %s142 = sphi 0, %s144
      %s145 = sphi 0, %s142
      %s146 = sphi 0, %s145
      %s162 = sphi 0, %s146
      %s168 = sphi 0, %s170
      %s171 = sphi 0, %s168
      %s172 = sphi 0, %s171
      %s188 = sphi 0, %s172
      %s194 = sphi 0, %s196
      %s197 = sphi 0, %s194
      %s198 = sphi 0, %s197
      %s214 = sphi 0, %s198
      %s218 = sphi 0, %s218
      %s220 = sphi 0, %s218
      %s221 = sphi 0, %s220
      %s235 = sphi 0, %s221
      %s239 = sphi 0, %s239
      %s241 = sphi 0, %s239
      %s242 = sphi 0, %s241
      %s256 = sphi 0, %s242
      %s260 = sphi 0, %s260
      %s262 = sphi 0, %s260
      %s263 = sphi 0, %s262
      %s277 = sphi 0, %s263
    $region4: #{bert_classifier_forward.1} parent=1 // loop_header_branch
      %20 = sbr.rel (%p18) target = $region8
    $region5: #{bert_classifier_forward.1} parent=1 // loop_body
      %s22 = ssub.s32 %s17, 1
      %s23 = ssub.s32 %s17, 2
      %s24 = sadd.s32 %s17, 1
      %s26 = sadd.s32 %s25, 1
      %p29 = scmp.eq.s32.totalorder %s17, 1
      %p30 = scmp.ne.s32.totalorder %s25, %s27
      %p31 = scmp.eq.s32.totalorder %s17, 0
      %p32 = por %p30, %p31
      %p33 = scmp.ne.s32.totalorder %s25, %s27
      %p34 = scmp.eq.s32.totalorder %s22, 1
      %p35 = por %p33, %p34
      %p36 = scmp.ne.s32.totalorder %s27, %s28
      %p37 = scmp.eq.s32.totalorder %s22, 0
      %p38 = por %p36, %p37
      %p39 = scmp.ne.s32.totalorder %s27, %s28
      %p40 = scmp.eq.s32.totalorder %s23, 1
      %p41 = por %p39, %p40
      %p43 = scmp.ne.s32.totalorder %s28, %s42
      %p44 = scmp.eq.s32.totalorder %s23, 0
      %p45 = por %p43, %p44
      %s47 = sadd.s32 %s46, 1
      %p50 = scmp.eq.s32.totalorder %s17, 1
      %p51 = scmp.ne.s32.totalorder %s46, %s48
      %p52 = scmp.eq.s32.totalorder %s17, 0
      %p53 = por %p51, %p52
      %p54 = scmp.ne.s32.totalorder %s46, %s48
      %p55 = scmp.eq.s32.totalorder %s22, 1
      %p56 = por %p54, %p55
      %p57 = scmp.ne.s32.totalorder %s48, %s49
      %p58 = scmp.eq.s32.totalorder %s22, 0
      %p59 = por %p57, %p58
      %p60 = scmp.ne.s32.totalorder %s48, %s49
      %p61 = scmp.eq.s32.totalorder %s23, 1
      %p62 = por %p60, %p61
      %p64 = scmp.ne.s32.totalorder %s49, %s63
      %p65 = scmp.eq.s32.totalorder %s23, 0
      %p66 = por %p64, %p65
      %s68 = sadd.s32 %s67, 1
      %p71 = scmp.eq.s32.totalorder %s17, 1
      %p72 = scmp.ne.s32.totalorder %s67, %s69
      %p73 = scmp.eq.s32.totalorder %s17, 0
      %p74 = por %p72, %p73
      %p75 = scmp.ne.s32.totalorder %s67, %s69
      %p76 = scmp.eq.s32.totalorder %s22, 1
      %p77 = por %p75, %p76
      %p78 = scmp.ne.s32.totalorder %s69, %s70
      %p79 = scmp.eq.s32.totalorder %s22, 0
      %p80 = por %p78, %p79
      %p81 = scmp.ne.s32.totalorder %s69, %s70
      %p82 = scmp.eq.s32.totalorder %s23, 1
      %p83 = por %p81, %p82
      %p85 = scmp.ne.s32.totalorder %s70, %s84
      %p86 = scmp.eq.s32.totalorder %s23, 0
      %p87 = por %p85, %p86
      %s88 = ssub.s32 %s17, %s24
      %p89 = scmp.eq.s32.totalorder %s88, 0
      %s91 = sadd.s32 %s90, 1
      %s92 = scalar_select %p89, %s90, %s91
      %p95 = pneg %p89
      %p96 = scmp.eq.s32.totalorder %s17, 1
      %p97 = por %p95, %p96
      %p98 = scmp.ne.s32.totalorder %s90, %s93
      %p99 = scmp.eq.s32.totalorder %s17, 0
      %p100 = por %p98, %p99
      %p101 = scmp.ne.s32.totalorder %s90, %s93
      %p102 = scmp.eq.s32.totalorder %s22, 1
      %p103 = por %p101, %p102
      %p104 = scmp.ne.s32.totalorder %s93, %s94
      %p105 = scmp.eq.s32.totalorder %s22, 0
      %p106 = por %p104, %p105
      %p107 = scmp.ne.s32.totalorder %s93, %s94
      %p108 = scmp.eq.s32.totalorder %s23, 1
      %p109 = por %p107, %p108
      %p111 = scmp.ne.s32.totalorder %s94, %s110
      %p112 = scmp.eq.s32.totalorder %s23, 0
      %p113 = por %p111, %p112
      %s114 = ssub.s32 %s17, %s24
      %p115 = scmp.eq.s32.totalorder %s114, 0
      %s117 = sadd.s32 %s116, 1
      %s118 = scalar_select %p115, %s116, %s117
      %p121 = pneg %p115
      %p122 = scmp.eq.s32.totalorder %s17, 1
      %p123 = por %p121, %p122
      %p124 = scmp.ne.s32.totalorder %s116, %s119
      %p125 = scmp.eq.s32.totalorder %s17, 0
      %p126 = por %p124, %p125
      %p127 = scmp.ne.s32.totalorder %s116, %s119
      %p128 = scmp.eq.s32.totalorder %s22, 1
      %p129 = por %p127, %p128
      %p130 = scmp.ne.s32.totalorder %s119, %s120
      %p131 = scmp.eq.s32.totalorder %s22, 0
      %p132 = por %p130, %p131
      %p133 = scmp.ne.s32.totalorder %s119, %s120
      %p134 = scmp.eq.s32.totalorder %s23, 1
      %p135 = por %p133, %p134
      %p137 = scmp.ne.s32.totalorder %s120, %s136
      %p138 = scmp.eq.s32.totalorder %s23, 0
      %p139 = por %p137, %p138
      %s140 = ssub.s32 %s17, %s24
      %p141 = scmp.eq.s32.totalorder %s140, 0
      %s143 = sadd.s32 %s142, 1
      %s144 = scalar_select %p141, %s142, %s143
      %p147 = pneg %p141
      %p148 = scmp.eq.s32.totalorder %s17, 1
      %p149 = por %p147, %p148
      %p150 = scmp.ne.s32.totalorder %s142, %s145
      %p151 = scmp.eq.s32.totalorder %s17, 0
      %p152 = por %p150, %p151
      %p153 = scmp.ne.s32.totalorder %s142, %s145
      %p154 = scmp.eq.s32.totalorder %s22, 1
      %p155 = por %p153, %p154
      %p156 = scmp.ne.s32.totalorder %s145, %s146
      %p157 = scmp.eq.s32.totalorder %s22, 0
      %p158 = por %p156, %p157
      %p159 = scmp.ne.s32.totalorder %s145, %s146
      %p160 = scmp.eq.s32.totalorder %s23, 1
      %p161 = por %p159, %p160
      %p163 = scmp.ne.s32.totalorder %s146, %s162
      %p164 = scmp.eq.s32.totalorder %s23, 0
      %p165 = por %p163, %p164
      %s166 = ssub.s32 %s17, %s24
      %p167 = scmp.eq.s32.totalorder %s166, 0
      %s169 = sadd.s32 %s168, 1
      %s170 = scalar_select %p167, %s168, %s169
      %p173 = pneg %p167
      %p174 = scmp.eq.s32.totalorder %s17, 1
      %p175 = por %p173, %p174
      %p176 = scmp.ne.s32.totalorder %s168, %s171
      %p177 = scmp.eq.s32.totalorder %s17, 0
      %p178 = por %p176, %p177
      %p179 = scmp.ne.s32.totalorder %s168, %s171
      %p180 = scmp.eq.s32.totalorder %s22, 1
      %p181 = por %p179, %p180
      %p182 = scmp.ne.s32.totalorder %s171, %s172
      %p183 = scmp.eq.s32.totalorder %s22, 0
      %p184 = por %p182, %p183
      %p185 = scmp.ne.s32.totalorder %s171, %s172
      %p186 = scmp.eq.s32.totalorder %s23, 1
      %p187 = por %p185, %p186
      %p189 = scmp.ne.s32.totalorder %s172, %s188
      %p190 = scmp.eq.s32.totalorder %s23, 0
      %p191 = por %p189, %p190
      %s192 = ssub.s32 %s17, %s24
      %p193 = scmp.eq.s32.totalorder %s192, 0
      %s195 = sadd.s32 %s194, 1
      %s196 = scalar_select %p193, %s194, %s195
      %p199 = pneg %p193
      %p200 = scmp.eq.s32.totalorder %s17, 1
      %p201 = por %p199, %p200
      %p202 = scmp.ne.s32.totalorder %s194, %s197
      %p203 = scmp.eq.s32.totalorder %s17, 0
      %p204 = por %p202, %p203
      %p205 = scmp.ne.s32.totalorder %s194, %s197
      %p206 = scmp.eq.s32.totalorder %s22, 1
      %p207 = por %p205, %p206
      %p208 = scmp.ne.s32.totalorder %s197, %s198
      %p209 = scmp.eq.s32.totalorder %s22, 0
      %p210 = por %p208, %p209
      %p211 = scmp.ne.s32.totalorder %s197, %s198
      %p212 = scmp.eq.s32.totalorder %s23, 1
      %p213 = por %p211, %p212
      %p215 = scmp.ne.s32.totalorder %s198, %s214
      %p216 = scmp.eq.s32.totalorder %s23, 0
      %p217 = por %p215, %p216
      %s219 = sadd.s32 %s218, 1
      %p222 = scmp.eq.s32.totalorder %s17, 1
      %p223 = scmp.ne.s32.totalorder %s218, %s220
      %p224 = scmp.eq.s32.totalorder %s17, 0
      %p225 = por %p223, %p224
      %p226 = scmp.ne.s32.totalorder %s218, %s220
      %p227 = scmp.eq.s32.totalorder %s22, 1
      %p228 = por %p226, %p227
      %p229 = scmp.ne.s32.totalorder %s220, %s221
      %p230 = scmp.eq.s32.totalorder %s22, 0
      %p231 = por %p229, %p230
      %p232 = scmp.ne.s32.totalorder %s220, %s221
      %p233 = scmp.eq.s32.totalorder %s23, 1
      %p234 = por %p232, %p233
      %p236 = scmp.ne.s32.totalorder %s221, %s235
      %p237 = scmp.eq.s32.totalorder %s23, 0
      %p238 = por %p236, %p237
      %s240 = sadd.s32 %s239, 1
      %p243 = scmp.eq.s32.totalorder %s17, 1
      %p244 = scmp.ne.s32.totalorder %s239, %s241
      %p245 = scmp.eq.s32.totalorder %s17, 0
      %p246 = por %p244, %p245
      %p247 = scmp.ne.s32.totalorder %s239, %s241
      %p248 = scmp.eq.s32.totalorder %s22, 1
      %p249 = por %p247, %p248
      %p250 = scmp.ne.s32.totalorder %s241, %s242
      %p251 = scmp.eq.s32.totalorder %s22, 0
      %p252 = por %p250, %p251
      %p253 = scmp.ne.s32.totalorder %s241, %s242
      %p254 = scmp.eq.s32.totalorder %s23, 1
      %p255 = por %p253, %p254
      %p257 = scmp.ne.s32.totalorder %s242, %s256
      %p258 = scmp.eq.s32.totalorder %s23, 0
      %p259 = por %p257, %p258
      %s261 = sadd.s32 %s260, 1
      %p264 = scmp.eq.s32.totalorder %s17, 1
      %p265 = scmp.ne.s32.totalorder %s260, %s262
      %p266 = scmp.eq.s32.totalorder %s17, 0
      %p267 = por %p265, %p266
      %p268 = scmp.ne.s32.totalorder %s260, %s262
      %p269 = scmp.eq.s32.totalorder %s22, 1
      %p270 = por %p268, %p269
      %p271 = scmp.ne.s32.totalorder %s262, %s263
      %p272 = scmp.eq.s32.totalorder %s22, 0
      %p273 = por %p271, %p272
      %p274 = scmp.ne.s32.totalorder %s262, %s263
      %p275 = scmp.eq.s32.totalorder %s23, 1
      %p276 = por %p274, %p275
      %p278 = scmp.ne.s32.totalorder %s263, %s277
      %p279 = scmp.eq.s32.totalorder %s23, 0
      %p280 = por %p278, %p279
      %p281 = scmp.le.s32.totalorder 1, %s17
      %p282 = scmp.lt.s32.totalorder %s17, 3
      %p283 = pnand %p281, %p282
      %p284 = pneg %p283
      // Predicated region
      $region9: #{bert_classifier_forward.1} parent=5 // pred_check
        _
      $region10: #{bert_classifier_forward.1} parent=5 // pred_check_branch
        %286 = sbr.rel (%p283) target = $region12
      $region11: #{bert_classifier_forward.1} parent=5 // pred_region
        %s287 = ssub.s32 %s17, 1
        // Predicated region
        $region13: #{bert_classifier_forward.1} parent=11 // pred_check
          %p288 = pneg %p38
        $region14: #{bert_classifier_forward.1} parent=11 // pred_check_branch
          %290 = sbr.rel (%p288) target = $region16
        $region15: #{bert_classifier_forward.1} parent=11 // pred_region
          _
        $region16: #{bert_classifier_forward.1} parent=11 // pred_fallthru
          _
        // Predicated region
        $region17: #{bert_classifier_forward.1} parent=11 // pred_check
          %p291 = pneg %p59
        $region18: #{bert_classifier_forward.1} parent=11 // pred_check_branch
          %293 = sbr.rel (%p291) target = $region20
        $region19: #{bert_classifier_forward.1} parent=11 // pred_region
          _
        $region20: #{bert_classifier_forward.1} parent=11 // pred_fallthru
          _
        // Predicated region
        $region21: #{bert_classifier_forward.1} parent=11 // pred_check
          %p294 = pneg %p80
        $region22: #{bert_classifier_forward.1} parent=11 // pred_check_branch
          %296 = sbr.rel (%p294) target = $region24
        $region23: #{bert_classifier_forward.1} parent=11 // pred_region
          _
        $region24: #{bert_classifier_forward.1} parent=11 // pred_fallthru
          _
        // Predicated region
        $region25: #{bert_classifier_forward.1} parent=11 // pred_check
          %p297 = pneg %p231
        $region26: #{bert_classifier_forward.1} parent=11 // pred_check_branch
          %299 = sbr.rel (%p297) target = $region28
        $region27: #{bert_classifier_forward.1} parent=11 // pred_region
          _
        $region28: #{bert_classifier_forward.1} parent=11 // pred_fallthru
          _
        // Predicated region
        $region29: #{bert_classifier_forward.1} parent=11 // pred_check
          %p300 = pneg %p252
        $region30: #{bert_classifier_forward.1} parent=11 // pred_check_branch
          %302 = sbr.rel (%p300) target = $region32
        $region31: #{bert_classifier_forward.1} parent=11 // pred_region
          _
        $region32: #{bert_classifier_forward.1} parent=11 // pred_fallthru
          _
      $region12: #{bert_classifier_forward.1} parent=5 // pred_fallthru
        _
      %p303 = scmp.lt.s32.totalorder %s17, 2
      // Predicated region
      $region33: #{bert_classifier_forward.1} parent=5 // pred_check
        %p304 = pneg %p303
      $region34: #{bert_classifier_forward.1} parent=5 // pred_check_branch
        %306 = sbr.rel (%p304) target = $region36
      $region35: #{bert_classifier_forward.1} parent=5 // pred_region
        // Predicated region
        $region37: #{bert_classifier_forward.1} parent=35 // pred_check
          %p307 = pneg %p100
        $region38: #{bert_classifier_forward.1} parent=35 // pred_check_branch
          %309 = sbr.rel (%p307) target = $region40
        $region39: #{bert_classifier_forward.1} parent=35 // pred_region
          %p310 = scmp.lt.s32.totalorder %s17, 1
          %s311 = scalar_select %p310, %s17, 1
          %s312 = smul.addr %s311, 4
          %s313 = smul.addr %s312, 4
          %s314 = scalar_lea.vmem %s3, %s313
        $region40: #{bert_classifier_forward.1} parent=35 // pred_fallthru
          _
        // Predicated region
        $region41: #{bert_classifier_forward.1} parent=35 // pred_check
          %p315 = pneg %p126
        $region42: #{bert_classifier_forward.1} parent=35 // pred_check_branch
          %317 = sbr.rel (%p315) target = $region44
        $region43: #{bert_classifier_forward.1} parent=35 // pred_region
          %p318 = scmp.lt.s32.totalorder %s17, 1
          %s319 = scalar_select %p318, %s17, 1
          %s320 = smul.addr %s319, 4
          %s321 = smul.addr %s320, 4
          %s322 = scalar_lea.vmem %s4, %s321
        $region44: #{bert_classifier_forward.1} parent=35 // pred_fallthru
          _
        // Predicated region
        $region45: #{bert_classifier_forward.1} parent=35 // pred_check
          %p323 = pneg %p152
        $region46: #{bert_classifier_forward.1} parent=35 // pred_check_branch
          %325 = sbr.rel (%p323) target = $region48
        $region47: #{bert_classifier_forward.1} parent=35 // pred_region
          %p326 = scmp.lt.s32.totalorder %s17, 1
          %s327 = scalar_select %p326, %s17, 1
          %s328 = smul.addr %s327, 4
          %s329 = smul.addr %s328, 4
          %s330 = scalar_lea.vmem %s5, %s329
        $region48: #{bert_classifier_forward.1} parent=35 // pred_fallthru
          _
        // Predicated region
        $region49: #{bert_classifier_forward.1} parent=35 // pred_check
          %p331 = pneg %p178
        $region50: #{bert_classifier_forward.1} parent=35 // pred_check_branch
          %333 = sbr.rel (%p331) target = $region52
        $region51: #{bert_classifier_forward.1} parent=35 // pred_region
          %p334 = scmp.lt.s32.totalorder %s17, 1
          %s335 = scalar_select %p334, %s17, 1
          %s336 = smul.addr %s335, 8
          %s337 = smul.addr %s336, 4
          %s338 = scalar_lea.vmem %s6, %s337
        $region52: #{bert_classifier_forward.1} parent=35 // pred_fallthru
          _
        // Predicated region
        $region53: #{bert_classifier_forward.1} parent=35 // pred_check
          %p339 = pneg %p204
        $region54: #{bert_classifier_forward.1} parent=35 // pred_check_branch
          %341 = sbr.rel (%p339) target = $region56
        $region55: #{bert_classifier_forward.1} parent=35 // pred_region
          %p342 = scmp.lt.s32.totalorder %s17, 1
          %s343 = scalar_select %p342, %s17, 1
          %s344 = smul.addr %s343, 8
          %s345 = scalar_lea.vmem %s7, %s344
        $region56: #{bert_classifier_forward.1} parent=35 // pred_fallthru
          _
      $region36: #{bert_classifier_forward.1} parent=5 // pred_fallthru
        _
      %p346 = scmp.le.s32.totalorder 1, %s17
      %p347 = scmp.lt.s32.totalorder %s17, 3
      %p348 = pnand %p346, %p347
      %p349 = pneg %p348
      // Predicated region
      $region57: #{bert_classifier_forward.1} parent=5 // pred_check
        _
      $region58: #{bert_classifier_forward.1} parent=5 // pred_check_branch
        %351 = sbr.rel (%p348) target = $region60
      $region59: #{bert_classifier_forward.1} parent=5 // pred_region
        %s352 = ssub.s32 %s17, 1
        %p353 = pneg %p38
        %p354 = pneg %p35
        %p355 = pneg %p59
        %p356 = pneg %p56
        %p357 = pneg %p80
        %p358 = pneg %p77
        %p359 = scmp.lt.s32.totalorder %s22, 1
        %s360 = scalar_select %p359, %s22, 1
        %s361 = smul.addr %s360, 4
        %s362 = smul.addr %s361, 4
        %s363 = scalar_lea.vmem %s3, %s362
        %p364 = pneg %p106
        %p365 = pneg %p103
        %p366 = scmp.lt.s32.totalorder %s22, 1
        %s367 = scalar_select %p366, %s22, 1
        %s368 = smul.addr %s367, 4
        %s369 = smul.addr %s368, 4
        %s370 = scalar_lea.vmem %s4, %s369
        %p371 = pneg %p132
        %p372 = pneg %p129
        %p373 = scmp.lt.s32.totalorder %s22, 1
        %s374 = scalar_select %p373, %s22, 1
        %s375 = smul.addr %s374, 4
        %s376 = smul.addr %s375, 4
        %s377 = scalar_lea.vmem %s5, %s376
        %p378 = pneg %p158
        %p379 = pneg %p155
        %p380 = scmp.lt.s32.totalorder %s22, 1
        %s381 = scalar_select %p380, %s22, 1
        %s382 = smul.addr %s381, 8
        %s383 = smul.addr %s382, 4
        %s384 = scalar_lea.vmem %s6, %s383
        %p385 = pneg %p184
        %p386 = pneg %p181
        %p387 = scmp.lt.s32.totalorder %s22, 1
        %s388 = scalar_select %p387, %s22, 1
        %s389 = smul.addr %s388, 8
        %s390 = scalar_lea.vmem %s7, %s389
        %p391 = pneg %p210
        %p392 = pneg %p207
        %p393 = pneg %p231
        %p394 = pneg %p228
        %p395 = pneg %p252
        %p396 = pneg %p249
        %p397 = pneg %p273
        %p398 = pneg %p270
        %p399 = scmp.lt.s32.totalorder %s22, 1
        %s400 = scalar_select %p399, %s22, 1
        %s401 = smul.addr %s400, 4
        %s402 = smul.addr %s401, 4
        %s403 = scalar_lea.vmem %s3, %s402
        %p404 = scmp.lt.s32.totalorder %s22, 1
        %s405 = scalar_select %p404, %s22, 1
        %s406 = smul.addr %s405, 4
        %s407 = smul.addr %s406, 4
        %s408 = scalar_lea.vmem %s4, %s407
        %p409 = scmp.lt.s32.totalorder %s22, 1
        %s410 = scalar_select %p409, %s22, 1
        %s411 = smul.addr %s410, 4
        %s412 = smul.addr %s411, 4
        %s413 = scalar_lea.vmem %s5, %s412
        %p414 = scmp.lt.s32.totalorder %s22, 1
        %s415 = scalar_select %p414, %s22, 1
        %s416 = smul.addr %s415, 8
        %s417 = smul.addr %s416, 4
        %s418 = scalar_lea.vmem %s6, %s417
        %p419 = scmp.lt.s32.totalorder %s22, 1
        %s420 = scalar_select %p419, %s22, 1
        %s421 = smul.addr %s420, 8
        %s422 = scalar_lea.vmem %s7, %s421
        %p424 = scmp.eq.s32.totalorder %s22, 0
        // Predicated region
        $region61: #{bert_classifier_forward.1} parent=59 // pred_check
          %p425 = pneg %p424
        $region62: #{bert_classifier_forward.1} parent=59 // pred_check_branch
          %427 = sbr.rel (%p425) target = $region64
        $region63: #{bert_classifier_forward.1} parent=59 // pred_region
          %v428 = vld [vmem:[%s0] sm:$0xff]
          %v429 = vld [vmem:[%s0 + $0x8] sm:$0xff]
          %v430 = vld [vmem:[%s2] sm:$0x1]
          %v431 = vld [vmem:[%s2 + $0x1] sm:$0x1]
          %vm432 = vcmask 261120
          %v433 = vsel %vm432, %v428, 0.0
          %434 = vadd.xlane.f32.xlu0 %v433
          %v435 = vpop.xlane.xlu0 %434
          %v436 = vsel %vm432, %v429, 0.0
          %437 = vadd.xlane.f32.xlu0 %v436
          %v438 = vpop.xlane.xlu0 %437
          %v439 = vrcp.pop 32.0
          %v440 = vmul.f32 %v435, %v439
          %v441 = vmul.f32 %v438, %v439
          %v442 = vsub.f32 %v428, %v440
          %v443 = vsub.f32 %v429, %v441
          %v444 = vmul.f32 %v442, %v442
          %v445 = vmul.f32 %v443, %v443
          %v446 = vsel %vm432, %v444, 0.0
          %447 = vadd.xlane.f32.xlu0 %v446
          %v448 = vpop.xlane.xlu0 %447
          %v449 = vsel %vm432, %v445, 0.0
          %450 = vadd.xlane.f32.xlu0 %v449
          %v451 = vpop.xlane.xlu0 %450
          %v452 = vmul.f32 %v448, %v439
          %v453 = vmul.f32 %v451, %v439
          %v454 = vadd.f32 %v452, 1e-12
          %v455 = vadd.f32 %v453, 1e-12
          %v456 = vrsqrt.pop %v454
          %v457 = vrsqrt.pop %v455
          %v458 = vmul.f32 %v442, %v456
          %v459 = vmul.f32 %v443, %v457
          %v460 = vlaneseq
          %v461 = vshrl.u32 %v460, 7
          %v462 = vsub.s32 0, %v461
          %v463 = vrot.slane %v430, %v462
          %v464 = vmul.f32 %v458, %v463
          %v465 = vmul.f32 %v459, %v463
          %v466 = vlaneseq
          %v467 = vshrl.u32 %v466, 7
          %v468 = vsub.s32 0, %v467
          %v469 = vrot.slane %v431, %v468
          %v470 = vadd.f32 %v464, %v469
          %v471 = vadd.f32 %v465, %v469
          %472 = vst.msk [vmem:[#allocation2] sm:$0xff] %vm432, %v470
          %473 = vst.msk [vmem:[#allocation2 + $0x8] sm:$0xff] %vm432, %v471
        $region64: #{bert_classifier_forward.1} parent=59 // pred_fallthru
          _
        %v474 = vld [vmem:[#allocation2] sm:$0xff]
        %v475 = vld [vmem:[#allocation2 + $0x8] sm:$0xff]
        %v476 = vpack.c.bf16 %v475, %v474
        %v477 = vld [vmem:[%s1] sm:$0x1]
        %v478 = vld [vmem:[%s1 + $0x1] sm:$0x1]
        %v479 = vld [vmem:[%s422] sm:$0x1]
        %v480 = vld [vmem:[%s403] sm:$0xf]
        %v481 = vld [vmem:[%s403 + $0x4] sm:$0xf]
        %v482 = vld [vmem:[%s403 + $0x8] sm:$0xf]
        %v483 = vld [vmem:[%s403 + $0xc] sm:$0xf]
        %v484 = vlaneseq
        %v485 = vshrl.u32 %v484, 7
        %v486 = vsub.s32 0, %v485
        %v487 = vrot.slane %v479, %v486
        %v492 = vunpack.c.l.b16 %v480
        %v493 = vunpack.c.l.b16 %v481
        %v494 = vunpack.c.l.b16 %v482
        %v495 = vunpack.c.l.b16 %v483
        %v496 = vpack.c.b16 %v493, %v492
        %v497 = vpack.c.b16 %v495, %v494
        %vm500 = vcmask 261120
        %v502 = vsel %vm500, %v476, 0
        %504 = vmatprep.subr.bf16.mxu0 0
        %505 = vmatpush1.bf16.msra.mxu0 %v496
        %506 = vmatprep.subr.bf16.mxu0 0
        %507 = vmatpush1.bf16.msra.mxu0 %v497
        %508 = vmatprep.subr.bf16.mxu0 0
        %509 = vmatpush1.bf16.msra.mxu0 0
        %510 = vmatprep.subr.bf16.mxu0 0
        %511 = vmatpush1.bf16.msra.mxu0 0
        %512 = vmatprep.subr.bf16.mxu0 0
        %513 = vmatpush1.bf16.msra.mxu0 0
        %514 = vmatprep.subr.bf16.mxu0 0
        %515 = vmatpush1.bf16.msra.mxu0 0
        %516 = vmatprep.subr.bf16.mxu0 0
        %517 = vmatpush1.bf16.msra.mxu0 0
        %518 = vmatprep.subr.bf16.mxu0 0
        %519 = vmatpush1.bf16.msra.mxu0 0
        %520 = vmatprep.subr.bf16.mxu0 0
        %521 = vmatpush1.bf16.msra.mxu0 0
        %522 = vmatprep.subr.bf16.mxu0 0
        %523 = vmatpush1.bf16.msra.mxu0 0
        %524 = vmatprep.subr.bf16.mxu0 0
        %525 = vmatpush1.bf16.msra.mxu0 0
        %526 = vmatprep.subr.bf16.mxu0 0
        %527 = vmatpush1.bf16.msra.mxu0 0
        %528 = vmatprep.subr.bf16.mxu0 0
        %529 = vmatpush1.bf16.msra.mxu0 0
        %530 = vmatprep.subr.bf16.mxu0 0
        %531 = vmatpush1.bf16.msra.mxu0 0
        %532 = vmatprep.subr.bf16.mxu0 0
        %533 = vmatpush1.bf16.msra.mxu0 0
        %534 = vmatprep.subr.bf16.mxu0 0
        %535 = vmatpush1.bf16.msra.mxu0 0
        %536 = vmatprep.mubr.bf16.mxu0 0
        %537 = vmatmul.mubr.bf16.gmra.mrb[0].mxu0 %v502
        %v538 = vpop.f32.mrb[0].mxu0
        %v539 = vadd.f32 %v487, %v538
        %v540 = vpop.f32.mrb[0].mxu0
        %v541 = vpop.f32.mrb[0].mxu0
        %v542 = vadd.f32 %v487, %v541
        %v543 = vpop.f32.mrb[0].mxu0
        %544 = vdwg.mxu0
        %v545 = vpack.c.bf16 %v539, %v539
        %v546 = vpack.c.bf16 %v542, %v542
        %548 = vrot.lane.b32.xlu0 %v545, 96
        %v549 = vpop.permute.xlu0 %548
        %vm550 = vcmask 64512
        %v552 = vsel %vm550, %v545, 0
        %v555 = vsel %vm550, %v549, 0
        %557 = vmatprep.subr.bf16.mxu0 0
        %558 = vmatpush1.bf16.xpose.msra.mxu0 %v555
        %559 = vmatprep.subr.bf16.mxu0 0
        %560 = vmatpush1.bf16.xpose.msra.mxu0 0
        %561 = vmatprep.subr.bf16.mxu0 0
        %562 = vmatpush1.bf16.xpose.msra.mxu0 0
        %563 = vmatprep.subr.bf16.mxu0 0
        %564 = vmatpush1.bf16.xpose.msra.mxu0 0
        %565 = vmatprep.subr.bf16.mxu0 0
        %566 = vmatpush1.bf16.xpose.msra.mxu0 0
        %567 = vmatprep.subr.bf16.mxu0 0
        %568 = vmatpush1.bf16.xpose.msra.mxu0 0
        %569 = vmatprep.subr.bf16.mxu0 0
        %570 = vmatpush1.bf16.xpose.msra.mxu0 0
        %571 = vmatprep.subr.bf16.mxu0 0
        %572 = vmatpush1.bf16.xpose.msra.mxu0 0
        %573 = vmatprep.subr.bf16.mxu0 0
        %574 = vmatpush1.bf16.xpose.msra.mxu0 0
        %575 = vmatprep.subr.bf16.mxu0 0
        %576 = vmatpush1.bf16.xpose.msra.mxu0 0
        %577 = vmatprep.subr.bf16.mxu0 0
        %578 = vmatpush1.bf16.xpose.msra.mxu0 0
        %579 = vmatprep.subr.bf16.mxu0 0
        %580 = vmatpush1.bf16.xpose.msra.mxu0 0
        %581 = vmatprep.subr.bf16.mxu0 0
        %582 = vmatpush1.bf16.xpose.msra.mxu0 0
        %583 = vmatprep.subr.bf16.mxu0 0
        %584 = vmatpush1.bf16.xpose.msra.mxu0 0
        %585 = vmatprep.subr.bf16.mxu0 0
        %586 = vmatpush1.bf16.xpose.msra.mxu0 0
        %587 = vmatprep.subr.bf16.mxu0 0
        %588 = vmatpush1.bf16.xpose.msra.mxu0 0
        %589 = vmatprep.mubr.bf16.mxu0 0
        %590 = vmatmul.mubr.bf16.gmra.mrb[0].mxu0 %v552
        %v591 = vpop.f32.mrb[0].mxu0
        %v592 = vadd.f32 0.0, %v591
        %v593 = vpop.f32.mrb[0].mxu0
        %v594 = vpop.f32.mrb[0].mxu0
        %v595 = vpop.f32.mrb[0].mxu0
        %596 = vdwg.mxu0
        %598 = vrot.lane.b32.xlu0 %v546, 96
        %v599 = vpop.permute.xlu0 %598
        %v601 = vsel %vm550, %v546, 0
        %v604 = vsel %vm550, %v599, 0
        %606 = vmatprep.subr.bf16.mxu0 0
        %607 = vmatpush1.bf16.xpose.msra.mxu0 %v604
        %608 = vmatprep.subr.bf16.mxu0 0
        %609 = vmatpush1.bf16.xpose.msra.mxu0 0
        %610 = vmatprep.subr.bf16.mxu0 0
        %611 = vmatpush1.bf16.xpose.msra.mxu0 0
        %612 = vmatprep.subr.bf16.mxu0 0
        %613 = vmatpush1.bf16.xpose.msra.mxu0 0
        %614 = vmatprep.subr.bf16.mxu0 0
        %615 = vmatpush1.bf16.xpose.msra.mxu0 0
        %616 = vmatprep.subr.bf16.mxu0 0
        %617 = vmatpush1.bf16.xpose.msra.mxu0 0
        %618 = vmatprep.subr.bf16.mxu0 0
        %619 = vmatpush1.bf16.xpose.msra.mxu0 0
        %620 = vmatprep.subr.bf16.mxu0 0
        %621 = vmatpush1.bf16.xpose.msra.mxu0 0
        %622 = vmatprep.subr.bf16.mxu0 0
        %623 = vmatpush1.bf16.xpose.msra.mxu0 0
        %624 = vmatprep.subr.bf16.mxu0 0
        %625 = vmatpush1.bf16.xpose.msra.mxu0 0
        %626 = vmatprep.subr.bf16.mxu0 0
        %627 = vmatpush1.bf16.xpose.msra.mxu0 0
        %628 = vmatprep.subr.bf16.mxu0 0
        %629 = vmatpush1.bf16.xpose.msra.mxu0 0
        %630 = vmatprep.subr.bf16.mxu0 0
        %631 = vmatpush1.bf16.xpose.msra.mxu0 0
        %632 = vmatprep.subr.bf16.mxu0 0
        %633 = vmatpush1.bf16.xpose.msra.mxu0 0
        %634 = vmatprep.subr.bf16.mxu0 0
        %635 = vmatpush1.bf16.xpose.msra.mxu0 0
        %636 = vmatprep.subr.bf16.mxu0 0
        %637 = vmatpush1.bf16.xpose.msra.mxu0 0
        %638 = vmatprep.mubr.bf16.mxu0 0
        %639 = vmatmul.mubr.bf16.gmra.mrb[0].mxu0 %v601
        %v640 = vpop.f32.mrb[0].mxu0
        %v641 = vadd.f32 0.0, %v640
        %v642 = vpop.f32.mrb[0].mxu0
        %v643 = vpop.f32.mrb[0].mxu0
        %v644 = vpop.f32.mrb[0].mxu0
        %645 = vdwg.mxu0
        %v646 = vmul.f32 %v592, 0.35355338
        %v647 = vmul.f32 %v641, 0.35355338
        %v650 = vlaneseq
        %v651 = vshrl.u32 %v650, 7
        %v652 = vsub.s32 0, %v651
        %v653 = vrot.slane %v477, %v652
        %v654 = vlaneseq
        %v655 = vshrl.u32 %v654, 7
        %v656 = vsub.s32 0, %v655
        %v657 = vrot.slane %v478, %v656
        %v660 = vadd.f32 %v646, %v653
        %v661 = vadd.f32 %v647, %v657
        %v662 = vsel %vm550, %v660, -inf
        %663 = vmax.xlane.f32.xlu0 %v662
        %v664 = vpop.xlane.xlu0 %663
        %v665 = vsel %vm550, %v661, -inf
        %666 = vmax.xlane.f32.xlu0 %v665
        %v667 = vpop.xlane.xlu0 %666
        %v668 = vsub.f32 %v660, %v664
        %v669 = vsub.f32 %v661, %v667
        %v670 = vmul.f32 %v668, 1.442695
        %v671 = vpow.pop %v670
        %v672 = vmul.f32 %v669, 1.442695
        %v673 = vpow.pop %v672
        %v674 = vsel %vm550, %v671, 0.0
        %675 = vadd.xlane.f32.xlu0 %v674
        %v676 = vpop.xlane.xlu0 %675
        %v677 = vsel %vm550, %v673, 0.0
        %678 = vadd.xlane.f32.xlu0 %v677
        %v679 = vpop.xlane.xlu0 %678
        %v680 = vrcp.pop %v676
        %v681 = vrcp.pop %v679
        %v682 = vmul.f32 %v671, %v680
        %v683 = vmul.f32 %v673, %v681
        %v684 = vpack.c.bf16 %v682, %v682
        %v685 = vpack.c.bf16 %v683, %v683
        %686 = vrot.lane.b32.xlu0 %v545, 64
        %v687 = vpop.permute.xlu0 %686
        %v689 = vsel %vm550, %v684, 0
        %vm691 = vcmask 1043456
        %v693 = vsel %vm691, %v687, 0
        %695 = vmatprep.subr.bf16.mxu0 0
        %696 = vmatpush1.bf16.msra.mxu0 %v693
        %697 = vmatprep.subr.bf16.mxu0 0
        %698 = vmatpush1.bf16.msra.mxu0 0
        %699 = vmatprep.subr.bf16.mxu0 0
        %700 = vmatpush1.bf16.msra.mxu0 0
        %701 = vmatprep.subr.bf16.mxu0 0
        %702 = vmatpush1.bf16.msra.mxu0 0
        %703 = vmatprep.subr.bf16.mxu0 0
        %704 = vmatpush1.bf16.msra.mxu0 0
        %705 = vmatprep.subr.bf16.mxu0 0
        %706 = vmatpush1.bf16.msra.mxu0 0
        %707 = vmatprep.subr.bf16.mxu0 0
        %708 = vmatpush1.bf16.msra.mxu0 0
        %709 = vmatprep.subr.bf16.mxu0 0
        %710 = vmatpush1.bf16.msra.mxu0 0
        %711 = vmatprep.subr.bf16.mxu0 0
        %712 = vmatpush1.bf16.msra.mxu0 0
        %713 = vmatprep.subr.bf16.mxu0 0
        %714 = vmatpush1.bf16.msra.mxu0 0
        %715 = vmatprep.subr.bf16.mxu0 0
        %716 = vmatpush1.bf16.msra.mxu0 0
        %717 = vmatprep.subr.bf16.mxu0 0
        %718 = vmatpush1.bf16.msra.mxu0 0
        %719 = vmatprep.subr.bf16.mxu0 0
        %720 = vmatpush1.bf16.msra.mxu0 0
        %721 = vmatprep.subr.bf16.mxu0 0
        %722 = vmatpush1.bf16.msra.mxu0 0
        %723 = vmatprep.subr.bf16.mxu0 0
        %724 = vmatpush1.bf16.msra.mxu0 0
        %725 = vmatprep.subr.bf16.mxu0 0
        %726 = vmatpush1.bf16.msra.mxu0 0
        %727 = vmatprep.mubr.bf16.mxu0 0
        %728 = vmatmul.mubr.bf16.gmra.mrb[0].mxu0 %v689
        %v729 = vpop.f32.mrb[0].mxu0
        %v730 = vadd.f32 0.0, %v729
        %v731 = vpop.f32.mrb[0].mxu0
        %v732 = vpop.f32.mrb[0].mxu0
        %v733 = vpop.f32.mrb[0].mxu0
        %734 = vdwg.mxu0
        %735 = vrot.lane.b32.xlu0 %v546, 64
        %v736 = vpop.permute.xlu0 %735
        %v738 = vsel %vm550, %v685, 0
        %v741 = vsel %vm691, %v736, 0
        %743 = vmatprep.subr.bf16.mxu0 0
        %744 = vmatpush1.bf16.msra.mxu0 %v741
        %745 = vmatprep.subr.bf16.mxu0 0
        %746 = vmatpush1.bf16.msra.mxu0 0
        %747 = vmatprep.subr.bf16.mxu0 0
        %748 = vmatpush1.bf16.msra.mxu0 0
        %749 = vmatprep.subr.bf16.mxu0 0
        %750 = vmatpush1.bf16.msra.mxu0 0
        %751 = vmatprep.subr.bf16.mxu0 0
        %752 = vmatpush1.bf16.msra.mxu0 0
        %753 = vmatprep.subr.bf16.mxu0 0
        %754 = vmatpush1.bf16.msra.mxu0 0
        %755 = vmatprep.subr.bf16.mxu0 0
        %756 = vmatpush1.bf16.msra.mxu0 0
        %757 = vmatprep.subr.bf16.mxu0 0
        %758 = vmatpush1.bf16.msra.mxu0 0
        %759 = vmatprep.subr.bf16.mxu0 0
        %760 = vmatpush1.bf16.msra.mxu0 0
        %761 = vmatprep.subr.bf16.mxu0 0
        %762 = vmatpush1.bf16.msra.mxu0 0
        %763 = vmatprep.subr.bf16.mxu0 0
        %764 = vmatpush1.bf16.msra.mxu0 0
        %765 = vmatprep.subr.bf16.mxu0 0
        %766 = vmatpush1.bf16.msra.mxu0 0
        %767 = vmatprep.subr.bf16.mxu0 0
        %768 = vmatpush1.bf16.msra.mxu0 0
        %769 = vmatprep.subr.bf16.mxu0 0
        %770 = vmatpush1.bf16.msra.mxu0 0
        %771 = vmatprep.subr.bf16.mxu0 0
        %772 = vmatpush1.bf16.msra.mxu0 0
        %773 = vmatprep.subr.bf16.mxu0 0
        %774 = vmatpush1.bf16.msra.mxu0 0
        %775 = vmatprep.mubr.bf16.mxu0 0
        %776 = vmatmul.mubr.bf16.gmra.mrb[0].mxu0 %v738
        %v777 = vpop.f32.mrb[0].mxu0
        %v778 = vadd.f32 0.0, %v777
        %v779 = vpop.f32.mrb[0].mxu0
        %v780 = vpop.f32.mrb[0].mxu0
        %v781 = vpop.f32.mrb[0].mxu0
        %782 = vdwg.mxu0
        %783 = vrot.lane.b32.xlu0 %v545, 120
        %v784 = vpop.permute.xlu0 %783
        %785 = vrot.lane.b32.xlu0 %v545, 88
        %v786 = vpop.permute.xlu0 %785
        %v788 = vsel %vm550, %v784, 0
        %v791 = vsel %vm550, %v786, 0
        %793 = vmatprep.subr.bf16.mxu0 0
        %794 = vmatpush1.bf16.xpose.msra.mxu0 %v791
        %795 = vmatprep.subr.bf16.mxu0 0
        %796 = vmatpush1.bf16.xpose.msra.mxu0 0
        %797 = vmatprep.subr.bf16.mxu0 0
        %798 = vmatpush1.bf16.xpose.msra.mxu0 0
        %799 = vmatprep.subr.bf16.mxu0 0
        %800 = vmatpush1.bf16.xpose.msra.mxu0 0
        %801 = vmatprep.subr.bf16.mxu0 0
        %802 = vmatpush1.bf16.xpose.msra.mxu0 0
        %803 = vmatprep.subr.bf16.mxu0 0
        %804 = vmatpush1.bf16.xpose.msra.mxu0 0
        %805 = vmatprep.subr.bf16.mxu0 0
        %806 = vmatpush1.bf16.xpose.msra.mxu0 0
        %807 = vmatprep.subr.bf16.mxu0 0
        %808 = vmatpush1.bf16.xpose.msra.mxu0 0
        %809 = vmatprep.subr.bf16.mxu0 0
        %810 = vmatpush1.bf16.xpose.msra.mxu0 0
        %811 = vmatprep.subr.bf16.mxu0 0
        %812 = vmatpush1.bf16.xpose.msra.mxu0 0
        %813 = vmatprep.subr.bf16.mxu0 0
        %814 = vmatpush1.bf16.xpose.msra.mxu0 0
        %815 = vmatprep.subr.bf16.mxu0 0
        %816 = vmatpush1.bf16.xpose.msra.mxu0 0
        %817 = vmatprep.subr.bf16.mxu0 0
        %818 = vmatpush1.bf16.xpose.msra.mxu0 0
        %819 = vmatprep.subr.bf16.mxu0 0
        %820 = vmatpush1.bf16.xpose.msra.mxu0 0
        %821 = vmatprep.subr.bf16.mxu0 0
        %822 = vmatpush1.bf16.xpose.msra.mxu0 0
        %823 = vmatprep.subr.bf16.mxu0 0
        %824 = vmatpush1.bf16.xpose.msra.mxu0 0
        %825 = vmatprep.mubr.bf16.mxu0 0
        %826 = vmatmul.mubr.bf16.gmra.mrb[0].mxu0 %v788
        %v827 = vpop.f32.mrb[0].mxu0
        %v828 = vadd.f32 0.0, %v827
        %v829 = vpop.f32.mrb[0].mxu0
        %v830 = vpop.f32.mrb[0].mxu0
        %v831 = vpop.f32.mrb[0].mxu0
        %832 = vdwg.mxu0
        %833 = vrot.lane.b32.xlu0 %v546, 120
        %v834 = vpop.permute.xlu0 %833
        %835 = vrot.lane.b32.xlu0 %v546, 88
        %v836 = vpop.permute.xlu0 %835
        %v838 = vsel %vm550, %v834, 0
        %v841 = vsel %vm550, %v836, 0
        %843 = vmatprep.subr.bf16.mxu0 0
        %844 = vmatpush1.bf16.xpose.msra.mxu0 %v841
        %845 = vmatprep.subr.bf16.mxu0 0
        %846 = vmatpush1.bf16.xpose.msra.mxu0 0
        %847 = vmatprep.subr.bf16.mxu0 0
        %848 = vmatpush1.bf16.xpose.msra.mxu0 0
        %849 = vmatprep.subr.bf16.mxu0 0
        %850 = vmatpush1.bf16.xpose.msra.mxu0 0
        %851 = vmatprep.subr.bf16.mxu0 0
        %852 = vmatpush1.bf16.xpose.msra.mxu0 0
        %853 = vmatprep.subr.bf16.mxu0 0
        %854 = vmatpush1.bf16.xpose.msra.mxu0 0
        %855 = vmatprep.subr.bf16.mxu0 0
        %856 = vmatpush1.bf16.xpose.msra.mxu0 0
        %857 = vmatprep.subr.bf16.mxu0 0
        %858 = vmatpush1.bf16.xpose.msra.mxu0 0
        %859 = vmatprep.subr.bf16.mxu0 0
        %860 = vmatpush1.bf16.xpose.msra.mxu0 0
        %861 = vmatprep.subr.bf16.mxu0 0
        %862 = vmatpush1.bf16.xpose.msra.mxu0 0
        %863 = vmatprep.subr.bf16.mxu0 0
        %864 = vmatpush1.bf16.xpose.msra.mxu0 0
        %865 = vmatprep.subr.bf16.mxu0 0
        %866 = vmatpush1.bf16.xpose.msra.mxu0 0
        %867 = vmatprep.subr.bf16.mxu0 0
        %868 = vmatpush1.bf16.xpose.msra.mxu0 0
        %869 = vmatprep.subr.bf16.mxu0 0
        %870 = vmatpush1.bf16.xpose.msra.mxu0 0
        %871 = vmatprep.subr.bf16.mxu0 0
        %872 = vmatpush1.bf16.xpose.msra.mxu0 0
        %873 = vmatprep.subr.bf16.mxu0 0
        %874 = vmatpush1.bf16.xpose.msra.mxu0 0
        %875 = vmatprep.mubr.bf16.mxu0 0
        %876 = vmatmul.mubr.bf16.gmra.mrb[0].mxu0 %v838
        %v877 = vpop.f32.mrb[0].mxu0
        %v878 = vadd.f32 0.0, %v877
        %v879 = vpop.f32.mrb[0].mxu0
        %v880 = vpop.f32.mrb[0].mxu0
        %v881 = vpop.f32.mrb[0].mxu0
        %882 = vdwg.mxu0
        %v883 = vmul.f32 %v828, 0.35355338
        %v884 = vmul.f32 %v878, 0.35355338
        %v885 = vadd.f32 %v883, %v653
        %v886 = vadd.f32 %v884, %v657
        %v887 = vsel %vm550, %v885, -inf
        %888 = vmax.xlane.f32.xlu0 %v887
        %v889 = vpop.xlane.xlu0 %888
        %v890 = vsel %vm550, %v886, -inf
        %891 = vmax.xlane.f32.xlu0 %v890
        %v892 = vpop.xlane.xlu0 %891
        %v893 = vsub.f32 %v885, %v889
        %v894 = vsub.f32 %v886, %v892
        %v895 = vmul.f32 %v893, 1.442695
        %v896 = vpow.pop %v895
        %v897 = vmul.f32 %v894, 1.442695
        %v898 = vpow.pop %v897
        %v899 = vsel %vm550, %v896, 0.0
        %900 = vadd.xlane.f32.xlu0 %v899
        %v901 = vpop.xlane.xlu0 %900
        %v902 = vsel %vm550, %v898, 0.0
        %903 = vadd.xlane.f32.xlu0 %v902
        %v904 = vpop.xlane.xlu0 %903
        %v905 = vrcp.pop %v901
        %v906 = vrcp.pop %v904
        %v907 = vmul.f32 %v896, %v905
        %v908 = vmul.f32 %v898, %v906
        %v909 = vpack.c.bf16 %v907, %v907
        %v910 = vpack.c.bf16 %v908, %v908
        %911 = vrot.lane.b32.xlu0 %v545, 56
        %v912 = vpop.permute.xlu0 %911
        %v914 = vsel %vm550, %v909, 0
        %v917 = vsel %vm691, %v912, 0
        %919 = vmatprep.subr.bf16.mxu0 0
        %920 = vmatpush1.bf16.msra.mxu0 %v917
        %921 = vmatprep.subr.bf16.mxu0 0
        %922 = vmatpush1.bf16.msra.mxu0 0
        %923 = vmatprep.subr.bf16.mxu0 0
        %924 = vmatpush1.bf16.msra.mxu0 0
        %925 = vmatprep.subr.bf16.mxu0 0
        %926 = vmatpush1.bf16.msra.mxu0 0
        %927 = vmatprep.subr.bf16.mxu0 0
        %928 = vmatpush1.bf16.msra.mxu0 0
        %929 = vmatprep.subr.bf16.mxu0 0
        %930 = vmatpush1.bf16.msra.mxu0 0
        %931 = vmatprep.subr.bf16.mxu0 0
        %932 = vmatpush1.bf16.msra.mxu0 0
        %933 = vmatprep.subr.bf16.mxu0 0
        %934 = vmatpush1.bf16.msra.mxu0 0
        %935 = vmatprep.subr.bf16.mxu0 0
        %936 = vmatpush1.bf16.msra.mxu0 0
        %937 = vmatprep.subr.bf16.mxu0 0
        %938 = vmatpush1.bf16.msra.mxu0 0
        %939 = vmatprep.subr.bf16.mxu0 0
        %940 = vmatpush1.bf16.msra.mxu0 0
        %941 = vmatprep.subr.bf16.mxu0 0
        %942 = vmatpush1.bf16.msra.mxu0 0
        %943 = vmatprep.subr.bf16.mxu0 0
        %944 = vmatpush1.bf16.msra.mxu0 0
        %945 = vmatprep.subr.bf16.mxu0 0
        %946 = vmatpush1.bf16.msra.mxu0 0
        %947 = vmatprep.subr.bf16.mxu0 0
        %948 = vmatpush1.bf16.msra.mxu0 0
        %949 = vmatprep.subr.bf16.mxu0 0
        %950 = vmatpush1.bf16.msra.mxu0 0
        %951 = vmatprep.mubr.bf16.mxu0 0
        %952 = vmatmul.mubr.bf16.gmra.mrb[0].mxu0 %v914
        %v953 = vpop.f32.mrb[0].mxu0
        %v954 = vadd.f32 0.0, %v953
        %v955 = vpop.f32.mrb[0].mxu0
        %v956 = vpop.f32.mrb[0].mxu0
        %v957 = vpop.f32.mrb[0].mxu0
        %958 = vdwg.mxu0
        %959 = vrot.lane.b32.xlu0 %v546, 56
        %v960 = vpop.permute.xlu0 %959
        %v962 = vsel %vm550, %v910, 0
        %v965 = vsel %vm691, %v960, 0
        %967 = vmatprep.subr.bf16.mxu0 0
        %968 = vmatpush1.bf16.msra.mxu0 %v965
        %969 = vmatprep.subr.bf16.mxu0 0
        %970 = vmatpush1.bf16.msra.mxu0 0
        %971 = vmatprep.subr.bf16.mxu0 0
        %972 = vmatpush1.bf16.msra.mxu0 0
        %973 = vmatprep.subr.bf16.mxu0 0
        %974 = vmatpush1.bf16.msra.mxu0 0
        %975 = vmatprep.subr.bf16.mxu0 0
        %976 = vmatpush1.bf16.msra.mxu0 0
        %977 = vmatprep.subr.bf16.mxu0 0
        %978 = vmatpush1.bf16.msra.mxu0 0
        %979 = vmatprep.subr.bf16.mxu0 0
        %980 = vmatpush1.bf16.msra.mxu0 0
        %981 = vmatprep.subr.bf16.mxu0 0
        %982 = vmatpush1.bf16.msra.mxu0 0
        %983 = vmatprep.subr.bf16.mxu0 0
        %984 = vmatpush1.bf16.msra.mxu0 0
        %985 = vmatprep.subr.bf16.mxu0 0
        %986 = vmatpush1.bf16.msra.mxu0 0
        %987 = vmatprep.subr.bf16.mxu0 0
        %988 = vmatpush1.bf16.msra.mxu0 0
        %989 = vmatprep.subr.bf16.mxu0 0
        %990 = vmatpush1.bf16.msra.mxu0 0
        %991 = vmatprep.subr.bf16.mxu0 0
        %992 = vmatpush1.bf16.msra.mxu0 0
        %993 = vmatprep.subr.bf16.mxu0 0
        %994 = vmatpush1.bf16.msra.mxu0 0
        %995 = vmatprep.subr.bf16.mxu0 0
        %996 = vmatpush1.bf16.msra.mxu0 0
        %997 = vmatprep.subr.bf16.mxu0 0
        %998 = vmatpush1.bf16.msra.mxu0 0
        %999 = vmatprep.mubr.bf16.mxu0 0
        %1000 = vmatmul.mubr.bf16.gmra.mrb[0].mxu0 %v962
        %v1001 = vpop.f32.mrb[0].mxu0
        %v1002 = vadd.f32 0.0, %v1001
        %v1003 = vpop.f32.mrb[0].mxu0
        %v1004 = vpop.f32.mrb[0].mxu0
        %v1005 = vpop.f32.mrb[0].mxu0
        %1006 = vdwg.mxu0
        %1007 = vrot.lane.b32.xlu0 %v545, 112
        %v1008 = vpop.permute.xlu0 %1007
        %1009 = vrot.lane.b32.xlu0 %v545, 80
        %v1010 = vpop.permute.xlu0 %1009
        %v1012 = vsel %vm550, %v1008, 0
        %v1015 = vsel %vm550, %v1010, 0
        %1017 = vmatprep.subr.bf16.mxu0 0
        %1018 = vmatpush1.bf16.xpose.msra.mxu0 %v1015
        %1019 = vmatprep.subr.bf16.mxu0 0
        %1020 = vmatpush1.bf16.xpose.msra.mxu0 0
        %1021 = vmatprep.subr.bf16.mxu0 0
        %1022 = vmatpush1.bf16.xpose.msra.mxu0 0
        %1023 = vmatprep.subr.bf16.mxu0 0
        %1024 = vmatpush1.bf16.xpose.msra.mxu0 0
        %1025 = vmatprep.subr.bf16.mxu0 0
        %1026 = vmatpush1.bf16.xpose.msra.mxu0 0
        %1027 = vmatprep.subr.bf16.mxu0 0
        %1028 = vmatpush1.bf16.xpose.msra.mxu0 0
        %1029 = vmatprep.subr.bf16.mxu0 0
        %1030 = vmatpush1.bf16.xpose.msra.mxu0 0
        %1031 = vmatprep.subr.bf16.mxu0 0
        %1032 = vmatpush1.bf16.xpose.msra.mxu0 0
        %1033 = vmatprep.subr.bf16.mxu0 0
        %1034 = vmatpush1.bf16.xpose.msra.mxu0 0
        %1035 = vmatprep.subr.bf16.mxu0 0
        %1036 = vmatpush1.bf16.xpose.msra.mxu0 0
        %1037 = vmatprep.subr.bf16.mxu0 0
        %1038 = vmatpush1.bf16.xpose.msra.mxu0 0
        %1039 = vmatprep.subr.bf16.mxu0 0
        %1040 = vmatpush1.bf16.xpose.msra.mxu0 0
        %1041 = vmatprep.subr.bf16.mxu0 0
        %1042 = vmatpush1.bf16.xpose.msra.mxu0 0
        %1043 = vmatprep.subr.bf16.mxu0 0
        %1044 = vmatpush1.bf16.xpose.msra.mxu0 0
        %1045 = vmatprep.subr.bf16.mxu0 0
        %1046 = vmatpush1.bf16.xpose.msra.mxu0 0
        %1047 = vmatprep.subr.bf16.mxu0 0
        %1048 = vmatpush1.bf16.xpose.msra.mxu0 0
        %1049 = vmatprep.mubr.bf16.mxu0 0
        %1050 = vmatmul.mubr.bf16.gmra.mrb[0].mxu0 %v1012
        %v1051 = vpop.f32.mrb[0].mxu0
        %v1052 = vadd.f32 0.0, %v1051
        %v1053 = vpop.f32.mrb[0].mxu0
        %v1054 = vpop.f32.mrb[0].mxu0
        %v1055 = vpop.f32.mrb[0].mxu0
        %1056 = vdwg.mxu0
        %1057 = vrot.lane.b32.xlu0 %v546, 112
        %v1058 = vpop.permute.xlu0 %1057
        %1059 = vrot.lane.b32.xlu0 %v546, 80
        %v1060 = vpop.permute.xlu0 %1059
        %v1062 = vsel %vm550, %v1058, 0
        %v1065 = vsel %vm550, %v1060, 0
        %1067 = vmatprep.subr.bf16.mxu0 0
        %1068 = vmatpush1.bf16.xpose.msra.mxu0 %v1065
        %1069 = vmatprep.subr.bf16.mxu0 0
        %1070 = vmatpush1.bf16.xpose.msra.mxu0 0
        %1071 = vmatprep.subr.bf16.mxu0 0
        %1072 = vmatpush1.bf16.xpose.msra.mxu0 0
        %1073 = vmatprep.subr.bf16.mxu0 0
        %1074 = vmatpush1.bf16.xpose.msra.mxu0 0
        %1075 = vmatprep.subr.bf16.mxu0 0
        %1076 = vmatpush1.bf16.xpose.msra.mxu0 0
        %1077 = vmatprep.subr.bf16.mxu0 0
        %1078 = vmatpush1.bf16.xpose.msra.mxu0 0
        %1079 = vmatprep.subr.bf16.mxu0 0
        %1080 = vmatpush1.bf16.xpose.msra.mxu0 0
        %1081 = vmatprep.subr.bf16.mxu0 0
        %1082 = vmatpush1.bf16.xpose.msra.mxu0 0
        %1083 = vmatprep.subr.bf16.mxu0 0
        %1084 = vmatpush1.bf16.xpose.msra.mxu0 0
        %1085 = vmatprep.subr.bf16.mxu0 0
        %1086 = vmatpush1.bf16.xpose.msra.mxu0 0
        %1087 = vmatprep.subr.bf16.mxu0 0
        %1088 = vmatpush1.bf16.xpose.msra.mxu0 0
        %1089 = vmatprep.subr.bf16.mxu0 0
        %1090 = vmatpush1.bf16.xpose.msra.mxu0 0
        %1091 = vmatprep.subr.bf16.mxu0 0
        %1092 = vmatpush1.bf16.xpose.msra.mxu0 0
        %1093 = vmatprep.subr.bf16.mxu0 0
        %1094 = vmatpush1.bf16.xpose.msra.mxu0 0
        %1095 = vmatprep.subr.bf16.mxu0 0
        %1096 = vmatpush1.bf16.xpose.msra.mxu0 0
        %1097 = vmatprep.subr.bf16.mxu0 0
        %1098 = vmatpush1.bf16.xpose.msra.mxu0 0
        %1099 = vmatprep.mubr.bf16.mxu0 0
        %1100 = vmatmul.mubr.bf16.gmra.mrb[0].mxu0 %v1062
        %v1101 = vpop.f32.mrb[0].mxu0
        %v1102 = vadd.f32 0.0, %v1101
        %v1103 = vpop.f32.mrb[0].mxu0
        %v1104 = vpop.f32.mrb[0].mxu0
        %v1105 = vpop.f32.mrb[0].mxu0
        %1106 = vdwg.mxu0
        %v1107 = vmul.f32 %v1052, 0.35355338
        %v1108 = vmul.f32 %v1102, 0.35355338
        %v1109 = vadd.f32 %v1107, %v653
        %v1110 = vadd.f32 %v1108, %v657
        %v1111 = vsel %vm550, %v1109, -inf
        %1112 = vmax.xlane.f32.xlu0 %v1111
        %v1113 = vpop.xlane.xlu0 %1112
        %v1114 = vsel %vm550, %v1110, -inf
        %1115 = vmax.xlane.f32.xlu0 %v1114
        %v1116 = vpop.xlane.xlu0 %1115
        %v1117 = vsub.f32 %v1109, %v1113
        %v1118 = vsub.f32 %v1110, %v1116
        %v1119 = vmul.f32 %v1117, 1.442695
        %v1120 = vpow.pop %v1119
        %v1121 = vmul.f32 %v1118, 1.442695
        %v1122 = vpow.pop %v1121
        %v1123 = vsel %vm550, %v1120, 0.0
        %1124 = vadd.xlane.f32.xlu0 %v1123
        %v1125 = vpop.xlane.xlu0 %1124
        %v1126 = vsel %vm550, %v1122, 0.0
        %1127 = vadd.xlane.f32.xlu0 %v1126
        %v1128 = vpop.xlane.xlu0 %1127
        %v1129 = vrcp.pop %v1125
        %v1130 = vrcp.pop %v1128
        %v1131 = vmul.f32 %v1120, %v1129
        %v1132 = vmul.f32 %v1122, %v1130
        %v1133 = vpack.c.bf16 %v1131, %v1131
        %v1134 = vpack.c.bf16 %v1132, %v1132
        %1135 = vrot.lane.b32.xlu0 %v545, 48
        %v1136 = vpop.permute.xlu0 %1135
        %v1138 = vsel %vm550, %v1133, 0
        %v1141 = vsel %vm691, %v1136, 0
        %1143 = vmatprep.subr.bf16.mxu0 0
        %1144 = vmatpush1.bf16.msra.mxu0 %v1141
        %1145 = vmatprep.subr.bf16.mxu0 0
        %1146 = vmatpush1.bf16.msra.mxu0 0
        %1147 = vmatprep.subr.bf16.mxu0 0
        %1148 = vmatpush1.bf16.msra.mxu0 0
        %1149 = vmatprep.subr.bf16.mxu0 0
        %1150 = vmatpush1.bf16.msra.mxu0 0
        %1151 = vmatprep.subr.bf16.mxu0 0
        %1152 = vmatpush1.bf16.msra.mxu0 0
        %1153 = vmatprep.subr.bf16.mxu0 0
        %1154 = vmatpush1.bf16.msra.mxu0 0
        %1155 = vmatprep.subr.bf16.mxu0 0
        %1156 = vmatpush1.bf16.msra.mxu0 0
        %1157 = vmatprep.subr.bf16.mxu0 0
        %1158 = vmatpush1.bf16.msra.mxu0 0
        %1159 = vmatprep.subr.bf16.mxu0 0
        %1160 = vmatpush1.bf16.msra.mxu0 0
        %1161 = vmatprep.subr.bf16.mxu0 0
        %1162 = vmatpush1.bf16.msra.mxu0 0
        %1163 = vmatprep.subr.bf16.mxu0 0
        %1164 = vmatpush1.bf16.msra.mxu0 0
        %1165 = vmatprep.subr.bf16.mxu0 0
        %1166 = vmatpush1.bf16.msra.mxu0 0
        %1167 = vmatprep.subr.bf16.mxu0 0
        %1168 = vmatpush1.bf16.msra.mxu0 0
        %1169 = vmatprep.subr.bf16.mxu0 0
        %1170 = vmatpush1.bf16.msra.mxu0 0
        %1171 = vmatprep.subr.bf16.mxu0 0
        %1172 = vmatpush1.bf16.msra.mxu0 0
        %1173 = vmatprep.subr.bf16.mxu0 0
        %1174 = vmatpush1.bf16.msra.mxu0 0
        %1175 = vmatprep.mubr.bf16.mxu0 0
        %1176 = vmatmul.mubr.bf16.gmra.mrb[0].mxu0 %v1138
        %v1177 = vpop.f32.mrb[0].mxu0
        %v1178 = vadd.f32 0.0, %v1177
        %v1179 = vpop.f32.mrb[0].mxu0
        %v1180 = vpop.f32.mrb[0].mxu0
        %v1181 = vpop.f32.mrb[0].mxu0
        %1182 = vdwg.mxu0
        %1183 = vrot.lane.b32.xlu0 %v546, 48
        %v1184 = vpop.permute.xlu0 %1183
        %v1186 = vsel %vm550, %v1134, 0
        %v1189 = vsel %vm691, %v1184, 0
        %1191 = vmatprep.subr.bf16.mxu0 0
        %1192 = vmatpush1.bf16.msra.mxu0 %v1189
        %1193 = vmatprep.subr.bf16.mxu0 0
        %1194 = vmatpush1.bf16.msra.mxu0 0
        %1195 = vmatprep.subr.bf16.mxu0 0
        %1196 = vmatpush1.bf16.msra.mxu0 0
        %1197 = vmatprep.subr.bf16.mxu0 0
        %1198 = vmatpush1.bf16.msra.mxu0 0
        %1199 = vmatprep.subr.bf16.mxu0 0
        %1200 = vmatpush1.bf16.msra.mxu0 0
        %1201 = vmatprep.subr.bf16.mxu0 0
        %1202 = vmatpush1.bf16.msra.mxu0 0
        %1203 = vmatprep.subr.bf16.mxu0 0
        %1204 = vmatpush1.bf16.msra.mxu0 0
        %1205 = vmatprep.subr.bf16.mxu0 0
        %1206 = vmatpush1.bf16.msra.mxu0 0
        %1207 = vmatprep.subr.bf16.mxu0 0
        %1208 = vmatpush1.bf16.msra.mxu0 0
        %1209 = vmatprep.subr.bf16.mxu0 0
        %1210 = vmatpush1.bf16.msra.mxu0 0
        %1211 = vmatprep.subr.bf16.mxu0 0
        %1212 = vmatpush1.bf16.msra.mxu0 0
        %1213 = vmatprep.subr.bf16.mxu0 0
        %1214 = vmatpush1.bf16.msra.mxu0 0
        %1215 = vmatprep.subr.bf16.mxu0 0
        %1216 = vmatpush1.bf16.msra.mxu0 0
        %1217 = vmatprep.subr.bf16.mxu0 0
        %1218 = vmatpush1.bf16.msra.mxu0 0
        %1219 = vmatprep.subr.bf16.mxu0 0
        %1220 = vmatpush1.bf16.msra.mxu0 0
        %1221 = vmatprep.subr.bf16.mxu0 0
        %1222 = vmatpush1.bf16.msra.mxu0 0
        %1223 = vmatprep.mubr.bf16.mxu0 0
        %1224 = vmatmul.mubr.bf16.gmra.mrb[0].mxu0 %v1186
        %v1225 = vpop.f32.mrb[0].mxu0
        %v1226 = vadd.f32 0.0, %v1225
        %v1227 = vpop.f32.mrb[0].mxu0
        %v1228 = vpop.f32.mrb[0].mxu0
        %v1229 = vpop.f32.mrb[0].mxu0
        %1230 = vdwg.mxu0
        %1231 = vrot.lane.b32.xlu0 %v545, 104
        %v1232 = vpop.permute.xlu0 %1231
        %1233 = vrot.lane.b32.xlu0 %v545, 72
        %v1234 = vpop.permute.xlu0 %1233
        %v1236 = vsel %vm550, %v1232, 0
        %v1239 = vsel %vm550, %v1234, 0
        %1241 = vmatprep.subr.bf16.mxu0 0
        %1242 = vmatpush1.bf16.xpose.msra.mxu0 %v1239
        %1243 = vmatprep.subr.bf16.mxu0 0
        %1244 = vmatpush1.bf16.xpose.msra.mxu0 0
        %1245 = vmatprep.subr.bf16.mxu0 0
        %1246 = vmatpush1.bf16.xpose.msra.mxu0 0
        %1247 = vmatprep.subr.bf16.mxu0 0
        %1248 = vmatpush1.bf16.xpose.msra.mxu0 0
        %1249 = vmatprep.subr.bf16.mxu0 0
        %1250 = vmatpush1.bf16.xpose.msra.mxu0 0
        %1251 = vmatprep.subr.bf16.mxu0 0
        %1252 = vmatpush1.bf16.xpose.msra.mxu0 0
        %1253 = vmatprep.subr.bf16.mxu0 0
        %1254 = vmatpush1.bf16.xpose.msra.mxu0 0
        %1255 = vmatprep.subr.bf16.mxu0 0
        %1256 = vmatpush1.bf16.xpose.msra.mxu0 0
        %1257 = vmatprep.subr.bf16.mxu0 0
        %1258 = vmatpush1.bf16.xpose.msra.mxu0 0
        %1259 = vmatprep.subr.bf16.mxu0 0
        %1260 = vmatpush1.bf16.xpose.msra.mxu0 0
        %1261 = vmatprep.subr.bf16.mxu0 0
        %1262 = vmatpush1.bf16.xpose.msra.mxu0 0
        %1263 = vmatprep.subr.bf16.mxu0 0
        %1264 = vmatpush1.bf16.xpose.msra.mxu0 0
        %1265 = vmatprep.subr.bf16.mxu0 0
        %1266 = vmatpush1.bf16.xpose.msra.mxu0 0
        %1267 = vmatprep.subr.bf16.mxu0 0
        %1268 = vmatpush1.bf16.xpose.msra.mxu0 0
        %1269 = vmatprep.subr.bf16.mxu0 0
        %1270 = vmatpush1.bf16.xpose.msra.mxu0 0
        %1271 = vmatprep.subr.bf16.mxu0 0
        %1272 = vmatpush1.bf16.xpose.msra.mxu0 0
        %1273 = vmatprep.mubr.bf16.mxu0 0
        %1274 = vmatmul.mubr.bf16.gmra.mrb[0].mxu0 %v1236
        %v1275 = vpop.f32.mrb[0].mxu0
        %v1276 = vadd.f32 0.0, %v1275
        %v1277 = vpop.f32.mrb[0].mxu0
        %v1278 = vpop.f32.mrb[0].mxu0
        %v1279 = vpop.f32.mrb[0].mxu0
        %1280 = vdwg.mxu0
        %1281 = vrot.lane.b32.xlu0 %v546, 104
        %v1282 = vpop.permute.xlu0 %1281
        %1283 = vrot.lane.b32.xlu0 %v546, 72
        %v1284 = vpop.permute.xlu0 %1283
        %v1286 = vsel %vm550, %v1282, 0
        %v1289 = vsel %vm550, %v1284, 0
        %1291 = vmatprep.subr.bf16.mxu0 0
        %1292 = vmatpush1.bf16.xpose.msra.mxu0 %v1289
        %1293 = vmatprep.subr.bf16.mxu0 0
        %1294 = vmatpush1.bf16.xpose.msra.mxu0 0
        %1295 = vmatprep.subr.bf16.mxu0 0
        %1296 = vmatpush1.bf16.xpose.msra.mxu0 0
        %1297 = vmatprep.subr.bf16.mxu0 0
        %1298 = vmatpush1.bf16.xpose.msra.mxu0 0
        %1299 = vmatprep.subr.bf16.mxu0 0
        %1300 = vmatpush1.bf16.xpose.msra.mxu0 0
        %1301 = vmatprep.subr.bf16.mxu0 0
        %1302 = vmatpush1.bf16.xpose.msra.mxu0 0
        %1303 = vmatprep.subr.bf16.mxu0 0
        %1304 = vmatpush1.bf16.xpose.msra.mxu0 0
        %1305 = vmatprep.subr.bf16.mxu0 0
        %1306 = vmatpush1.bf16.xpose.msra.mxu0 0
        %1307 = vmatprep.subr.bf16.mxu0 0
        %1308 = vmatpush1.bf16.xpose.msra.mxu0 0
        %1309 = vmatprep.subr.bf16.mxu0 0
        %1310 = vmatpush1.bf16.xpose.msra.mxu0 0
        %1311 = vmatprep.subr.bf16.mxu0 0
        %1312 = vmatpush1.bf16.xpose.msra.mxu0 0
        %1313 = vmatprep.subr.bf16.mxu0 0
        %1314 = vmatpush1.bf16.xpose.msra.mxu0 0
        %1315 = vmatprep.subr.bf16.mxu0 0
        %1316 = vmatpush1.bf16.xpose.msra.mxu0 0
        %1317 = vmatprep.subr.bf16.mxu0 0
        %1318 = vmatpush1.bf16.xpose.msra.mxu0 0
        %1319 = vmatprep.subr.bf16.mxu0 0
        %1320 = vmatpush1.bf16.xpose.msra.mxu0 0
        %1321 = vmatprep.subr.bf16.mxu0 0
        %1322 = vmatpush1.bf16.xpose.msra.mxu0 0
        %1323 = vmatprep.mubr.bf16.mxu0 0
        %1324 = vmatmul.mubr.bf16.gmra.mrb[0].mxu0 %v1286
        %v1325 = vpop.f32.mrb[0].mxu0
        %v1326 = vadd.f32 0.0, %v1325
        %v1327 = vpop.f32.mrb[0].mxu0
        %v1328 = vpop.f32.mrb[0].mxu0
        %v1329 = vpop.f32.mrb[0].mxu0
        %1330 = vdwg.mxu0
        %v1331 = vmul.f32 %v1276, 0.35355338
        %v1332 = vmul.f32 %v1326, 0.35355338
        %v1333 = vadd.f32 %v1331, %v653
        %v1334 = vadd.f32 %v1332, %v657
        %v1335 = vsel %vm550, %v1333, -inf
        %1336 = vmax.xlane.f32.xlu0 %v1335
        %v1337 = vpop.xlane.xlu0 %1336
        %v1338 = vsel %vm550, %v1334, -inf
        %1339 = vmax.xlane.f32.xlu0 %v1338
        %v1340 = vpop.xlane.xlu0 %1339
        %v1341 = vsub.f32 %v1333, %v1337
        %v1342 = vsub.f32 %v1334, %v1340
        %v1343 = vmul.f32 %v1341, 1.442695
        %v1344 = vpow.pop %v1343
        %v1345 = vmul.f32 %v1342, 1.442695
        %v1346 = vpow.pop %v1345
        %v1347 = vsel %vm550, %v1344, 0.0
        %1348 = vadd.xlane.f32.xlu0 %v1347
        %v1349 = vpop.xlane.xlu0 %1348
        %v1350 = vsel %vm550, %v1346, 0.0
        %1351 = vadd.xlane.f32.xlu0 %v1350
        %v1352 = vpop.xlane.xlu0 %1351
        %v1353 = vrcp.pop %v1349
        %v1354 = vrcp.pop %v1352
        %v1355 = vmul.f32 %v1344, %v1353
        %v1356 = vmul.f32 %v1346, %v1354
        %v1357 = vpack.c.bf16 %v1355, %v1355
        %v1358 = vpack.c.bf16 %v1356, %v1356
        %1359 = vrot.lane.b32.xlu0 %v545, 40
        %v1360 = vpop.permute.xlu0 %1359
        %v1362 = vsel %vm550, %v1357, 0
        %v1365 = vsel %vm691, %v1360, 0
        %1367 = vmatprep.subr.bf16.mxu0 0
        %1368 = vmatpush1.bf16.msra.mxu0 %v1365
        %1369 = vmatprep.subr.bf16.mxu0 0
        %1370 = vmatpush1.bf16.msra.mxu0 0
        %1371 = vmatprep.subr.bf16.mxu0 0
        %1372 = vmatpush1.bf16.msra.mxu0 0
        %1373 = vmatprep.subr.bf16.mxu0 0
        %1374 = vmatpush1.bf16.msra.mxu0 0
        %1375 = vmatprep.subr.bf16.mxu0 0
        %1376 = vmatpush1.bf16.msra.mxu0 0
        %1377 = vmatprep.subr.bf16.mxu0 0
        %1378 = vmatpush1.bf16.msra.mxu0 0
        %1379 = vmatprep.subr.bf16.mxu0 0
        %1380 = vmatpush1.bf16.msra.mxu0 0
        %1381 = vmatprep.subr.bf16.mxu0 0
        %1382 = vmatpush1.bf16.msra.mxu0 0
        %1383 = vmatprep.subr.bf16.mxu0 0
        %1384 = vmatpush1.bf16.msra.mxu0 0
        %1385 = vmatprep.subr.bf16.mxu0 0
        %1386 = vmatpush1.bf16.msra.mxu0 0
        %1387 = vmatprep.subr.bf16.mxu0 0
        %1388 = vmatpush1.bf16.msra.mxu0 0
        %1389 = vmatprep.subr.bf16.mxu0 0
        %1390 = vmatpush1.bf16.msra.mxu0 0
        %1391 = vmatprep.subr.bf16.mxu0 0
        %1392 = vmatpush1.bf16.msra.mxu0 0
        %1393 = vmatprep.subr.bf16.mxu0 0
        %1394 = vmatpush1.bf16.msra.mxu0 0
        %1395 = vmatprep.subr.bf16.mxu0 0
        %1396 = vmatpush1.bf16.msra.mxu0 0
        %1397 = vmatprep.subr.bf16.mxu0 0
        %1398 = vmatpush1.bf16.msra.mxu0 0
        %1399 = vmatprep.mubr.bf16.mxu0 0
        %1400 = vmatmul.mubr.bf16.gmra.mrb[0].mxu0 %v1362
        %v1401 = vpop.f32.mrb[0].mxu0
        %v1402 = vadd.f32 0.0, %v1401
        %v1403 = vpop.f32.mrb[0].mxu0
        %v1404 = vpop.f32.mrb[0].mxu0
        %v1405 = vpop.f32.mrb[0].mxu0
        %1406 = vdwg.mxu0
        %1407 = vrot.lane.b32.xlu0 %v546, 40
        %v1408 = vpop.permute.xlu0 %1407
        %v1410 = vsel %vm550, %v1358, 0
        %v1413 = vsel %vm691, %v1408, 0
        %1415 = vmatprep.subr.bf16.mxu0 0
        %1416 = vmatpush1.bf16.msra.mxu0 %v1413
        %1417 = vmatprep.subr.bf16.mxu0 0
        %1418 = vmatpush1.bf16.msra.mxu0 0
        %1419 = vmatprep.subr.bf16.mxu0 0
        %1420 = vmatpush1.bf16.msra.mxu0 0
        %1421 = vmatprep.subr.bf16.mxu0 0
        %1422 = vmatpush1.bf16.msra.mxu0 0
        %1423 = vmatprep.subr.bf16.mxu0 0
        %1424 = vmatpush1.bf16.msra.mxu0 0
        %1425 = vmatprep.subr.bf16.mxu0 0
        %1426 = vmatpush1.bf16.msra.mxu0 0
        %1427 = vmatprep.subr.bf16.mxu0 0
        %1428 = vmatpush1.bf16.msra.mxu0 0
        %1429 = vmatprep.subr.bf16.mxu0 0
        %1430 = vmatpush1.bf16.msra.mxu0 0
        %1431 = vmatprep.subr.bf16.mxu0 0
        %1432 = vmatpush1.bf16.msra.mxu0 0
        %1433 = vmatprep.subr.bf16.mxu0 0
        %1434 = vmatpush1.bf16.msra.mxu0 0
        %1435 = vmatprep.subr.bf16.mxu0 0
        %1436 = vmatpush1.bf16.msra.mxu0 0
        %1437 = vmatprep.subr.bf16.mxu0 0
        %1438 = vmatpush1.bf16.msra.mxu0 0
        %1439 = vmatprep.subr.bf16.mxu0 0
        %1440 = vmatpush1.bf16.msra.mxu0 0
        %1441 = vmatprep.subr.bf16.mxu0 0
        %1442 = vmatpush1.bf16.msra.mxu0 0
        %1443 = vmatprep.subr.bf16.mxu0 0
        %1444 = vmatpush1.bf16.msra.mxu0 0
        %1445 = vmatprep.subr.bf16.mxu0 0
        %1446 = vmatpush1.bf16.msra.mxu0 0
        %1447 = vmatprep.mubr.bf16.mxu0 0
        %1448 = vmatmul.mubr.bf16.gmra.mrb[0].mxu0 %v1410
        %v1449 = vpop.f32.mrb[0].mxu0
        %v1450 = vadd.f32 0.0, %v1449
        %v1451 = vpop.f32.mrb[0].mxu0
        %v1452 = vpop.f32.mrb[0].mxu0
        %v1453 = vpop.f32.mrb[0].mxu0
        %1454 = vdwg.mxu0
        %1457 = vrot.lane.b32.xlu0 %v954, 8
        %v1458 = vpop.permute.xlu0 %1457
        %1459 = vrot.lane.b32.xlu0 %v1002, 8
        %v1460 = vpop.permute.xlu0 %1459
        %1465 = vrot.lane.b32.xlu0 %v1178, 16
        %v1466 = vpop.permute.xlu0 %1465
        %1467 = vrot.lane.b32.xlu0 %v1226, 16
        %v1468 = vpop.permute.xlu0 %1467
        %1473 = vrot.lane.b32.xlu0 %v1402, 24
        %v1474 = vpop.permute.xlu0 %1473
        %1475 = vrot.lane.b32.xlu0 %v1450, 24
        %v1476 = vpop.permute.xlu0 %1475
        %v1479 = vsel %vm550, %v730, %v1458
        %v1480 = vsel %vm550, %v778, %v1460
        %vm1481 = vcmask 130048
        %v1482 = vsel %vm1481, %v1479, %v1466
        %v1483 = vsel %vm1481, %v1480, %v1468
        %vm1484 = vcmask 195584
        %v1485 = vsel %vm1484, %v1482, %v1474
        %v1486 = vsel %vm1484, %v1483, %v1476
        %v1487 = vld [vmem:[%s422 + $0x1] sm:$0x1]
        %v1488 = vpack.c.bf16 %v1486, %v1485
        %v1489 = vld [vmem:[%s408] sm:$0xf]
        %v1490 = vld [vmem:[%s408 + $0x4] sm:$0xf]
        %v1491 = vld [vmem:[%s408 + $0x8] sm:$0xf]
        %v1492 = vld [vmem:[%s408 + $0xc] sm:$0xf]
        %v1493 = vlaneseq
        %v1494 = vshrl.u32 %v1493, 7
        %v1495 = vsub.s32 0, %v1494
        %v1496 = vrot.slane %v1487, %v1495
        %v1501 = vunpack.c.l.b16 %v1489
        %v1502 = vunpack.c.l.b16 %v1490
        %v1503 = vunpack.c.l.b16 %v1491
        %v1504 = vunpack.c.l.b16 %v1492
        %v1505 = vpack.c.b16 %v1502, %v1501
        %v1506 = vpack.c.b16 %v1504, %v1503
        %v1510 = vsel %vm500, %v1488, 0
        %1512 = vmatprep.subr.bf16.mxu0 0
        %1513 = vmatpush1.bf16.msra.mxu0 %v1505
        %1514 = vmatprep.subr.bf16.mxu0 0
        %1515 = vmatpush1.bf16.msra.mxu0 %v1506
        %1516 = vmatprep.subr.bf16.mxu0 0
        %1517 = vmatpush1.bf16.msra.mxu0 0
        %1518 = vmatprep.subr.bf16.mxu0 0
        %1519 = vmatpush1.bf16.msra.mxu0 0
        %1520 = vmatprep.subr.bf16.mxu0 0
        %1521 = vmatpush1.bf16.msra.mxu0 0
        %1522 = vmatprep.subr.bf16.mxu0 0
        %1523 = vmatpush1.bf16.msra.mxu0 0
        %1524 = vmatprep.subr.bf16.mxu0 0
        %1525 = vmatpush1.bf16.msra.mxu0 0
        %1526 = vmatprep.subr.bf16.mxu0 0
        %1527 = vmatpush1.bf16.msra.mxu0 0
        %1528 = vmatprep.subr.bf16.mxu0 0
        %1529 = vmatpush1.bf16.msra.mxu0 0
        %1530 = vmatprep.subr.bf16.mxu0 0
        %1531 = vmatpush1.bf16.msra.mxu0 0
        %1532 = vmatprep.subr.bf16.mxu0 0
        %1533 = vmatpush1.bf16.msra.mxu0 0
        %1534 = vmatprep.subr.bf16.mxu0 0
        %1535 = vmatpush1.bf16.msra.mxu0 0
        %1536 = vmatprep.subr.bf16.mxu0 0
        %1537 = vmatpush1.bf16.msra.mxu0 0
        %1538 = vmatprep.subr.bf16.mxu0 0
        %1539 = vmatpush1.bf16.msra.mxu0 0
        %1540 = vmatprep.subr.bf16.mxu0 0
        %1541 = vmatpush1.bf16.msra.mxu0 0
        %1542 = vmatprep.subr.bf16.mxu0 0
        %1543 = vmatpush1.bf16.msra.mxu0 0
        %1544 = vmatprep.mubr.bf16.mxu0 0
        %1545 = vmatmul.mubr.bf16.gmra.mrb[0].mxu0 %v1510
        %v1546 = vpop.f32.mrb[0].mxu0
        %v1547 = vadd.f32 %v1496, %v1546
        %v1548 = vpop.f32.mrb[0].mxu0
        %v1549 = vpop.f32.mrb[0].mxu0
        %v1550 = vadd.f32 %v1496, %v1549
        %v1551 = vpop.f32.mrb[0].mxu0
        %1552 = vdwg.mxu0
        %v1553 = vadd.f32 %v1547, %v474
        %v1554 = vadd.f32 %v1550, %v475
        %v1555 = vld [vmem:[%s422 + $0x2] sm:$0x1]
        %v1556 = vld [vmem:[%s422 + $0x3] sm:$0x1]
        %v1557 = vsel %vm500, %v1553, 0.0
        %1558 = vadd.xlane.f32.xlu0 %v1557
        %v1559 = vpop.xlane.xlu0 %1558
        %v1560 = vsel %vm500, %v1554, 0.0
        %1561 = vadd.xlane.f32.xlu0 %v1560
        %v1562 = vpop.xlane.xlu0 %1561
        %v1563 = vrcp.pop 32.0
        %v1564 = vmul.f32 %v1559, %v1563
        %v1565 = vmul.f32 %v1562, %v1563
        %v1566 = vsub.f32 %v1553, %v1564
        %v1567 = vsub.f32 %v1554, %v1565
        %v1568 = vmul.f32 %v1566, %v1566
        %v1569 = vmul.f32 %v1567, %v1567
        %v1570 = vsel %vm500, %v1568, 0.0
        %1571 = vadd.xlane.f32.xlu0 %v1570
        %v1572 = vpop.xlane.xlu0 %1571
        %v1573 = vsel %vm500, %v1569, 0.0
        %1574 = vadd.xlane.f32.xlu0 %v1573
        %v1575 = vpop.xlane.xlu0 %1574
        %v1576 = vmul.f32 %v1572, %v1563
        %v1577 = vmul.f32 %v1575, %v1563
        %v1578 = vadd.f32 %v1576, 1e-12
        %v1579 = vadd.f32 %v1577, 1e-12
        %v1580 = vrsqrt.pop %v1578
        %v1581 = vrsqrt.pop %v1579
        %v1582 = vmul.f32 %v1566, %v1580
        %v1583 = vmul.f32 %v1567, %v1581
        %v1584 = vlaneseq
        %v1585 = vshrl.u32 %v1584, 7
        %v1586 = vsub.s32 0, %v1585
        %v1587 = vrot.slane %v1555, %v1586
        %v1588 = vmul.f32 %v1582, %v1587
        %v1589 = vmul.f32 %v1583, %v1587
        %v1590 = vlaneseq
        %v1591 = vshrl.u32 %v1590, 7
        %v1592 = vsub.s32 0, %v1591
        %v1593 = vrot.slane %v1556, %v1592
        %v1594 = vadd.f32 %v1588, %v1593
        %v1595 = vadd.f32 %v1589, %v1593
        %v1596 = vld [vmem:[%s422 + $0x4] sm:$0x1]
        %v1597 = vpack.c.bf16 %v1595, %v1594
        %v1598 = vld [vmem:[%s413] sm:$0xf]
        %v1599 = vld [vmem:[%s413 + $0x4] sm:$0xf]
        %v1600 = vld [vmem:[%s413 + $0x8] sm:$0xf]
        %v1601 = vld [vmem:[%s413 + $0xc] sm:$0xf]
        %v1602 = vlaneseq
        %v1603 = vshrl.u32 %v1602, 7
        %v1604 = vsub.s32 0, %v1603
        %v1605 = vrot.slane %v1596, %v1604
        %v1610 = vunpack.c.l.b16 %v1598
        %v1611 = vunpack.c.l.b16 %v1599
        %v1612 = vunpack.c.l.b16 %v1600
        %v1613 = vunpack.c.l.b16 %v1601
        %v1614 = vpack.c.b16 %v1611, %v1610
        %v1615 = vpack.c.b16 %v1613, %v1612
        %v1619 = vsel %vm500, %v1597, 0
        %1621 = vmatprep.subr.bf16.mxu0 0
        %1622 = vmatpush1.bf16.msra.mxu0 %v1614
        %1623 = vmatprep.subr.bf16.mxu0 0
        %1624 = vmatpush1.bf16.msra.mxu0 %v1615
        %1625 = vmatprep.subr.bf16.mxu0 0
        %1626 = vmatpush1.bf16.msra.mxu0 0
        %1627 = vmatprep.subr.bf16.mxu0 0
        %1628 = vmatpush1.bf16.msra.mxu0 0
        %1629 = vmatprep.subr.bf16.mxu0 0
        %1630 = vmatpush1.bf16.msra.mxu0 0
        %1631 = vmatprep.subr.bf16.mxu0 0
        %1632 = vmatpush1.bf16.msra.mxu0 0
        %1633 = vmatprep.subr.bf16.mxu0 0
        %1634 = vmatpush1.bf16.msra.mxu0 0
        %1635 = vmatprep.subr.bf16.mxu0 0
        %1636 = vmatpush1.bf16.msra.mxu0 0
        %1637 = vmatprep.subr.bf16.mxu0 0
        %1638 = vmatpush1.bf16.msra.mxu0 0
        %1639 = vmatprep.subr.bf16.mxu0 0
        %1640 = vmatpush1.bf16.msra.mxu0 0
        %1641 = vmatprep.subr.bf16.mxu0 0
        %1642 = vmatpush1.bf16.msra.mxu0 0
        %1643 = vmatprep.subr.bf16.mxu0 0
        %1644 = vmatpush1.bf16.msra.mxu0 0
        %1645 = vmatprep.subr.bf16.mxu0 0
        %1646 = vmatpush1.bf16.msra.mxu0 0
        %1647 = vmatprep.subr.bf16.mxu0 0
        %1648 = vmatpush1.bf16.msra.mxu0 0
        %1649 = vmatprep.subr.bf16.mxu0 0
        %1650 = vmatpush1.bf16.msra.mxu0 0
        %1651 = vmatprep.subr.bf16.mxu0 0
        %1652 = vmatpush1.bf16.msra.mxu0 0
        %1653 = vmatprep.mubr.bf16.mxu0 0
        %1654 = vmatmul.mubr.bf16.gmra.mrb[0].mxu0 %v1619
        %v1655 = vpop.f32.mrb[0].mxu0
        %v1656 = vadd.f32 %v1605, %v1655
        %v1657 = vpop.f32.mrb[0].mxu0
        %v1658 = vpop.f32.mrb[0].mxu0
        %v1659 = vadd.f32 %v1605, %v1658
        %v1660 = vpop.f32.mrb[0].mxu0
        %1661 = vdwg.mxu0
        %v1662 = vmul.f32 %v1656, 0.5
        %v1663 = vmul.f32 %v1659, 0.5
        %v1664 = vmul.f32 %v1656, 0.70710677
        %v1665 = vmul.f32 %v1659, 0.70710677
        %v1666 = verf.f32.pop %v1664
        %v1667 = verf.f32.pop %v1665
        %v1668 = vadd.f32 %v1666, 1.0
        %v1669 = vadd.f32 %v1667, 1.0
        %v1670 = vmul.f32 %v1662, %v1668
        %v1671 = vmul.f32 %v1663, %v1669
        %v1672 = vld [vmem:[%s422 + $0x5] sm:$0x1]
        %v1673 = vpack.c.bf16 %v1671, %v1670
        %v1674 = vld [vmem:[%s418] sm:$0xf]
        %v1675 = vld [vmem:[%s418 + $0x4] sm:$0xf]
        %v1676 = vld [vmem:[%s418 + $0x8] sm:$0xf]
        %v1677 = vld [vmem:[%s418 + $0xc] sm:$0xf]
        %v1678 = vld [vmem:[%s418 + $0x10] sm:$0xf]
        %v1679 = vld [vmem:[%s418 + $0x14] sm:$0xf]
        %v1680 = vld [vmem:[%s418 + $0x18] sm:$0xf]
        %v1681 = vld [vmem:[%s418 + $0x1c] sm:$0xf]
        %v1682 = vlaneseq
        %v1683 = vshrl.u32 %v1682, 7
        %v1684 = vsub.s32 0, %v1683
        %v1685 = vrot.slane %v1672, %v1684
        %v1694 = vunpack.c.l.b16 %v1674
        %v1695 = vunpack.c.l.b16 %v1675
        %v1696 = vunpack.c.l.b16 %v1676
        %v1697 = vunpack.c.l.b16 %v1677
        %v1698 = vunpack.c.l.b16 %v1678
        %v1699 = vunpack.c.l.b16 %v1679
        %v1700 = vunpack.c.l.b16 %v1680
        %v1701 = vunpack.c.l.b16 %v1681
        %v1702 = vpack.c.b16 %v1695, %v1694
        %v1703 = vpack.c.b16 %v1697, %v1696
        %v1704 = vpack.c.b16 %v1699, %v1698
        %v1705 = vpack.c.b16 %v1701, %v1700
        %vm1710 = vcmask 523264
        %v1712 = vsel %vm1710, %v1673, 0
        %1714 = vmatprep.subr.bf16.mxu0 0
        %1715 = vmatpush1.bf16.msra.mxu0 %v1702
        %1716 = vmatprep.subr.bf16.mxu0 0
        %1717 = vmatpush1.bf16.msra.mxu0 %v1703
        %1718 = vmatprep.subr.bf16.mxu0 0
        %1719 = vmatpush1.bf16.msra.mxu0 %v1704
        %1720 = vmatprep.subr.bf16.mxu0 0
        %1721 = vmatpush1.bf16.msra.mxu0 %v1705
        %1722 = vmatprep.subr.bf16.mxu0 0
        %1723 = vmatpush1.bf16.msra.mxu0 0
        %1724 = vmatprep.subr.bf16.mxu0 0
        %1725 = vmatpush1.bf16.msra.mxu0 0
        %1726 = vmatprep.subr.bf16.mxu0 0
        %1727 = vmatpush1.bf16.msra.mxu0 0
        %1728 = vmatprep.subr.bf16.mxu0 0
        %1729 = vmatpush1.bf16.msra.mxu0 0
        %1730 = vmatprep.subr.bf16.mxu0 0
        %1731 = vmatpush1.bf16.msra.mxu0 0
        %1732 = vmatprep.subr.bf16.mxu0 0
        %1733 = vmatpush1.bf16.msra.mxu0 0
        %1734 = vmatprep.subr.bf16.mxu0 0
        %1735 = vmatpush1.bf16.msra.mxu0 0
        %1736 = vmatprep.subr.bf16.mxu0 0
        %1737 = vmatpush1.bf16.msra.mxu0 0
        %1738 = vmatprep.subr.bf16.mxu0 0
        %1739 = vmatpush1.bf16.msra.mxu0 0
        %1740 = vmatprep.subr.bf16.mxu0 0
        %1741 = vmatpush1.bf16.msra.mxu0 0
        %1742 = vmatprep.subr.bf16.mxu0 0
        %1743 = vmatpush1.bf16.msra.mxu0 0
        %1744 = vmatprep.subr.bf16.mxu0 0
        %1745 = vmatpush1.bf16.msra.mxu0 0
        %1746 = vmatprep.mubr.bf16.mxu0 0
        %1747 = vmatmul.mubr.bf16.gmra.mrb[0].mxu0 %v1712
        %v1748 = vpop.f32.mrb[0].mxu0
        %v1749 = vadd.f32 %v1685, %v1748
        %v1750 = vpop.f32.mrb[0].mxu0
        %v1751 = vpop.f32.mrb[0].mxu0
        %v1752 = vadd.f32 %v1685, %v1751
        %v1753 = vpop.f32.mrb[0].mxu0
        %1754 = vdwg.mxu0
        %v1755 = vadd.f32 %v1749, %v1594
        %v1756 = vadd.f32 %v1752, %v1595
        %v1757 = vld [vmem:[%s422 + $0x6] sm:$0x1]
        %v1758 = vld [vmem:[%s422 + $0x7] sm:$0x1]
        %v1759 = vsel %vm500, %v1755, 0.0
        %1760 = vadd.xlane.f32.xlu0 %v1759
        %v1761 = vpop.xlane.xlu0 %1760
        %v1762 = vsel %vm500, %v1756, 0.0
        %1763 = vadd.xlane.f32.xlu0 %v1762
        %v1764 = vpop.xlane.xlu0 %1763
        %v1765 = vmul.f32 %v1761, %v1563
        %v1766 = vmul.f32 %v1764, %v1563
        %v1767 = vsub.f32 %v1755, %v1765
        %v1768 = vsub.f32 %v1756, %v1766
        %v1769 = vmul.f32 %v1767, %v1767
        %v1770 = vmul.f32 %v1768, %v1768
        %v1771 = vsel %vm500, %v1769, 0.0
        %1772 = vadd.xlane.f32.xlu0 %v1771
        %v1773 = vpop.xlane.xlu0 %1772
        %v1774 = vsel %vm500, %v1770, 0.0
        %1775 = vadd.xlane.f32.xlu0 %v1774
        %v1776 = vpop.xlane.xlu0 %1775
        %v1777 = vmul.f32 %v1773, %v1563
        %v1778 = vmul.f32 %v1776, %v1563
        %v1779 = vadd.f32 %v1777, 1e-12
        %v1780 = vadd.f32 %v1778, 1e-12
        %v1781 = vrsqrt.pop %v1779
        %v1782 = vrsqrt.pop %v1780
        %v1783 = vmul.f32 %v1767, %v1781
        %v1784 = vmul.f32 %v1768, %v1782
        %v1785 = vlaneseq
        %v1786 = vshrl.u32 %v1785, 7
        %v1787 = vsub.s32 0, %v1786
        %v1788 = vrot.slane %v1757, %v1787
        %v1789 = vmul.f32 %v1783, %v1788
        %v1790 = vmul.f32 %v1784, %v1788
        %v1791 = vlaneseq
        %v1792 = vshrl.u32 %v1791, 7
        %v1793 = vsub.s32 0, %v1792
        %v1794 = vrot.slane %v1758, %v1793
        %v1795 = vadd.f32 %v1789, %v1794
        %v1796 = vadd.f32 %v1790, %v1794
        %1797 = vst.msk [vmem:[#allocation2] sm:$0xff] %vm500, %v1795
        %1798 = vst.msk [vmem:[#allocation2 + $0x8] sm:$0xff] %vm500, %v1796
        %p1799 = scmp.eq.s32.totalorder %s22, 1
        // Predicated region
        $region65: #{bert_classifier_forward.1} parent=59 // pred_check
          %p1800 = pneg %p1799
        $region66: #{bert_classifier_forward.1} parent=59 // pred_check_branch
          %1802 = sbr.rel (%p1800) target = $region68
        $region67: #{bert_classifier_forward.1} parent=59 // pred_region
          %v1803 = vpack.c.bf16 %v1795, %v1795
          %v1804 = vpack.c.bf16 %v1796, %v1796
          %v1805 = vld [vmem:[%s8] sm:$0xf]
          %v1806 = vld [vmem:[%s8 + $0x4] sm:$0xf]
          %v1807 = vld [vmem:[%s8 + $0x8] sm:$0xf]
          %v1808 = vld [vmem:[%s8 + $0xc] sm:$0xf]
          %v1809 = vld [vmem:[%s9] sm:$0x1]
          %v1811 = vlaneseq
          %v1812 = vshrl.u32 %v1811, 7
          %v1813 = vsub.s32 0, %v1812
          %v1814 = vrot.slane %v1809, %v1813
          %v1818 = vunpack.c.l.b16 %v1803
          %v1819 = vunpack.c.l.b16 %v1804
          %v1820 = vrot.slane %v1819, 7
          %vm1821 = vcmask 1041409
          %v1822 = vsel %vm1821, %v1820, %v1818
          %v1823 = vpack.c.b16 %v1822, %v1822
          %v1828 = vunpack.c.l.b16 %v1805
          %v1829 = vunpack.c.l.b16 %v1806
          %v1830 = vunpack.c.l.b16 %v1807
          %v1831 = vunpack.c.l.b16 %v1808
          %v1832 = vpack.c.b16 %v1829, %v1828
          %v1833 = vpack.c.b16 %v1831, %v1830
          %v1837 = vsel %vm500, %v1823, 0
          %1839 = vmatprep.subr.bf16.mxu0 0
          %1840 = vmatpush1.bf16.msra.mxu0 %v1832
          %1841 = vmatprep.subr.bf16.mxu0 0
          %1842 = vmatpush1.bf16.msra.mxu0 %v1833
          %1843 = vmatprep.subr.bf16.mxu0 0
          %1844 = vmatpush1.bf16.msra.mxu0 0
          %1845 = vmatprep.subr.bf16.mxu0 0
          %1846 = vmatpush1.bf16.msra.mxu0 0
          %1847 = vmatprep.subr.bf16.mxu0 0
          %1848 = vmatpush1.bf16.msra.mxu0 0
          %1849 = vmatprep.subr.bf16.mxu0 0
          %1850 = vmatpush1.bf16.msra.mxu0 0
          %1851 = vmatprep.subr.bf16.mxu0 0
          %1852 = vmatpush1.bf16.msra.mxu0 0
          %1853 = vmatprep.subr.bf16.mxu0 0
          %1854 = vmatpush1.bf16.msra.mxu0 0
          %1855 = vmatprep.subr.bf16.mxu0 0
          %1856 = vmatpush1.bf16.msra.mxu0 0
          %1857 = vmatprep.subr.bf16.mxu0 0
          %1858 = vmatpush1.bf16.msra.mxu0 0
          %1859 = vmatprep.subr.bf16.mxu0 0
          %1860 = vmatpush1.bf16.msra.mxu0 0
          %1861 = vmatprep.subr.bf16.mxu0 0
          %1862 = vmatpush1.bf16.msra.mxu0 0
          %1863 = vmatprep.subr.bf16.mxu0 0
          %1864 = vmatpush1.bf16.msra.mxu0 0
          %1865 = vmatprep.subr.bf16.mxu0 0
          %1866 = vmatpush1.bf16.msra.mxu0 0
          %1867 = vmatprep.subr.bf16.mxu0 0
          %1868 = vmatpush1.bf16.msra.mxu0 0
          %1869 = vmatprep.subr.bf16.mxu0 0
          %1870 = vmatpush1.bf16.msra.mxu0 0
          %1871 = vmatprep.mubr.bf16.mxu0 0
          %1872 = vmatmul.mubr.bf16.gmra.mrb[0].mxu0 %v1837
          %v1873 = vpop.f32.mrb[0].mxu0
          %v1874 = vadd.f32 %v1814, %v1873
          %v1875 = vpop.f32.mrb[0].mxu0
          %v1876 = vpop.f32.mrb[0].mxu0
          %v1877 = vpop.f32.mrb[0].mxu0
          %1878 = vdwg.mxu0
          %1879 = vst [vmem:[#allocation3] sm:$0x3] %v1874
        $region68: #{bert_classifier_forward.1} parent=59 // pred_fallthru
          _
        // Predicated region
        $region69: #{bert_classifier_forward.1} parent=59 // pred_check
          %p1880 = pneg %p270
        $region70: #{bert_classifier_forward.1} parent=59 // pred_check_branch
          %1882 = sbr.rel (%p1880) target = $region72
        $region71: #{bert_classifier_forward.1} parent=59 // pred_region
          %s1884 = ssub.s32 32, 32
          %1885 = vsyncadd [#allocation4], %s1884
          %s1887 = sshll.u32 [#allocation3], 4
          %s1888 = int_to_ptr.vmem [resolvable:$true] %s1887
          %1890 = dma.vmem_to_hbm [thread:$0]  %s1888, 32, %s10, [#allocation4]
        $region72: #{bert_classifier_forward.1} parent=59 // pred_fallthru
          _
        // Predicated region
        $region73: #{bert_classifier_forward.1} parent=59 // pred_check
          %p1891 = pneg %p270
        $region74: #{bert_classifier_forward.1} parent=59 // pred_check_branch
          %1893 = sbr.rel (%p1891) target = $region76
        $region75: #{bert_classifier_forward.1} parent=59 // pred_region
          %1894 = dma.done [#allocation4], 32
        $region76: #{bert_classifier_forward.1} parent=59 // pred_fallthru
          _
      $region60: #{bert_classifier_forward.1} parent=5 // pred_fallthru
        _
      %p1895 = scmp.le.s32.totalorder 2, %s17
      // Predicated region
      $region77: #{bert_classifier_forward.1} parent=5 // pred_check
        %p1896 = pneg %p1895
      $region78: #{bert_classifier_forward.1} parent=5 // pred_check_branch
        %1898 = sbr.rel (%p1896) target = $region80
      $region79: #{bert_classifier_forward.1} parent=5 // pred_region
        %s1899 = ssub.s32 %s17, 2
      $region80: #{bert_classifier_forward.1} parent=5 // pred_fallthru
        _
    $region6: #{bert_classifier_forward.1} parent=1 // loop_footer
      %s21 = sadd.s32 1, %s17
    $region7: #{bert_classifier_forward.1} parent=1 // loop_footer_branch
      %16 = sbr.rel target = $region3
    $region8: #{bert_classifier_forward.1} parent=1 // loop_exit
      _
    %1900 = vsyncpa [#allocation4], 1
    %s1901 = scalar_lea.sflag [#allocation4], 1
    %1902 = vsyncpa %s1901, 1

</llo_original>
